<compile_context>
chip_gen: v7x
topology: tpu7x:2x2x1
jax: 0.10.0
libtpu: 0.0.40
codegen_flags: <defaults>
</compile_context>

<pallas_src>
import jax
import jax.numpy as jnp
from jax.experimental import pallas as pl
from jax.experimental.pallas import tpu as pltpu


def sphere_conv_kernel(xg_ref, itp_ref, w_ref, b_ref, o_ref):
    """One grid step = tile_bt batch rows x tile_n vertices (vertices on lanes).

    xg_ref : (TBT, J, C, TN)  gathered neighbour features
    itp_ref: (J, K, TN)       interpolation weights (shared across the bt block)
    w_ref  : (C, O, K)        conv weight, per input-channel (O, K) tap matrices
    b_ref  : (O, 1)           conv bias
    o_ref  : (TBT, O, TN)     lane-dense output block
    """
    TBT, J, C, TN = xg_ref.shape
    K = itp_ref.shape[1]
    O = o_ref.shape[1]

    bias = b_ref[...].astype(jnp.float32)                      # (O, 1)

    for b in range(TBT):
        # ---- interpolation (pure VPU, vertices dense in lanes) -------------
        #   y[c, k, n] = sum_j xg[b, j, c, n] * itp[j, k, n]
        # One (C, K, TN) fused multiply-add per neighbour j.
        def _term(j):
            x_j = xg_ref[b, j, :, :].astype(jnp.float32)        # (C, TN)
            itp_j = itp_ref[j].astype(jnp.float32)              # (K, TN)
            return x_j[:, None, :] * itp_j[None, :, :]          # (C, K, TN)

        y = _term(0)
        for j in range(1, J):
            y = y + _term(j)

        # ---- 1xK conv: per-input-channel (O, K) @ (K, TN) MXU dots ---------
        # MXU work is negligible here (contraction K<=9); the step is VPU/DMA
        # bound, so per-c dots accumulated in f32 are as good as a fused dot.
        acc = jnp.dot(w_ref[0].astype(jnp.float32), y[0],
                      preferred_element_type=jnp.float32)       # (O, TN)
        for c in range(1, C):
            acc = acc + jnp.dot(w_ref[c].astype(jnp.float32), y[c],
                                preferred_element_type=jnp.float32)

        o_ref[b, :, :] = (acc + bias).astype(o_ref.dtype)       # lane-dense store


def _pick_tile_n(N, desired):
    """Largest multiple of 128 that divides N, capped at `desired`; else full N."""
    best = None
    t = 128
    while t <= min(desired, N):
        if N % t == 0:
            best = t
        t += 128
    return best if best is not None else N


def _pick_tile_bt(BT, desired):
    for d in range(min(desired, BT), 0, -1):
        if BT % d == 0:
            return d
    return 1


def sphere_conv_forward(x, index, itp_mat, weight, bias, *, tile_n=512, tile_bt=8):
    """x: (B, T, N, C) float32.  Returns (B, T, N, O), matching SphereConv.forward."""
    B, T, N, C = x.shape
    BT = B * T
    J = index.shape[1]
    O = weight.shape[0]
    K = weight.shape[-1]

    tile_n = _pick_tile_n(N, tile_n)
    tile_bt = _pick_tile_bt(BT, tile_bt)
    assert N % tile_n == 0 and BT % tile_bt == 0

    # ---- glue (pure JAX, outside the kernel): gather + re-layout to vertices-minor ----
    xf = x.reshape(BT, N, C)
    xg = xf[:, index, :]                                   # (BT, N, J, C) gather
    xg = jnp.transpose(xg, (0, 2, 3, 1))                   # (BT, J, C, N)
    itp_t = jnp.transpose(itp_mat, (1, 2, 0))              # (J, K, N)
    w_c = jnp.transpose(weight[:, :, 0, :], (1, 0, 2))     # (C, O, K)
    b2 = bias.reshape(O, 1)

    # bt is the innermost grid axis so the itp / weight / bias block indices are
    # constant across consecutive steps (their DMAs are skipped after the first load).
    grid = (N // tile_n, BT // tile_bt)

    # Per-step VMEM (double-buffered blocks); raise the scoped-VMEM limit only if
    # needed (matters on v7x: 64 MiB physical / 32 MiB default scoped VMEM).
    blk_bytes = 4 * (tile_bt * J * C * tile_n + J * K * tile_n
                     + tile_bt * O * tile_n + C * O * K + O)
    vmem_limit = None
    if 2 * blk_bytes > 8 * 1024 * 1024:
        vmem_limit = min(4 * blk_bytes, 64 * 1024 * 1024)

    out = pl.pallas_call(
        sphere_conv_kernel,
        out_shape=jax.ShapeDtypeStruct((BT, O, N), x.dtype),
        grid=grid,
        in_specs=[
            pl.BlockSpec((tile_bt, J, C, tile_n), lambda i, b: (b, 0, 0, i)),  # xg
            pl.BlockSpec((J, K, tile_n), lambda i, b: (0, 0, i)),              # itp (const in b)
            pl.BlockSpec((C, O, K), lambda i, b: (0, 0, 0)),                   # weight (const)
            pl.BlockSpec((O, 1), lambda i, b: (0, 0)),                         # bias (const)
        ],
        out_specs=pl.BlockSpec((tile_bt, O, tile_n), lambda i, b: (b, 0, i)),
        compiler_params=pltpu.CompilerParams(
            dimension_semantics=("parallel", "parallel"),
            vmem_limit_bytes=vmem_limit),
    )(xg, itp_t, w_c, b2)

    # (BT, O, N) -> (B, T, N, O), the module's output convention.
    return jnp.transpose(out.reshape(B, T, O, N), (0, 1, 3, 2))


def sphere_conv_reference(x, index, itp_mat, weight, bias):
    """Pure-JAX transliteration of the PyTorch forward (for verification)."""
    B, T, N, C = x.shape
    BT = B * T
    O = weight.shape[0]
    xf = x.reshape(BT, N, C)
    t = jnp.transpose(xf, (1, 0, 2))                 # (N, BT, C)
    tg = t[index]                                    # (N, J, BT, C)
    tg = jnp.transpose(tg, (2, 3, 0, 1))             # (BT, C, N, J)
    y = jnp.einsum('bcnj,njk->bcnk', tg, itp_mat,
                   precision=jax.lax.Precision.HIGHEST)          # interpolate
    out = jnp.einsum('bcnk,ock->bon', y, weight[:, :, 0, :],
                     precision=jax.lax.Precision.HIGHEST)        # 1xK conv
    out = out + bias[None, :, None]
    out = out.reshape(B, T, O, N)
    return jnp.transpose(out, (0, 1, 3, 2))          # (B, T, N, O)


if __name__ == "__main__":
    key = jax.random.PRNGKey(0)
    B, T, N, C, O = 2, 2, 512, 4, 8
    J, K = 7, 9  # 7 sphere neighbours, conv kernel_size = 9
    k1, k2, k3, k4, k5 = jax.random.split(key, 5)

    x = jax.random.normal(k1, (B, T, N, C), dtype=jnp.float32)

    # Synthetic sphere-graph structures (gen_indexes replacement):
    # neighbour index (column 0 = vertex itself) and interpolation matrix.
    neigh = jax.random.randint(k2, (N, J - 1), 0, N)
    index = jnp.concatenate([jnp.arange(N)[:, None], neigh], axis=1).astype(jnp.int32)
    itp_mat = jax.random.uniform(k3, (N, J, K), dtype=jnp.float32)

    # Deterministic Conv2d(C, O, (1, K)) parameters.
    bound = 1.0 / float(C * K) ** 0.5
    weight = jax.random.uniform(k4, (O, C, 1, K), minval=-bound, maxval=bound,
                                dtype=jnp.float32)
    bias = jax.random.uniform(k5, (O,), minval=-bound, maxval=bound,
                              dtype=jnp.float32)

    fwd = jax.jit(sphere_conv_forward, static_argnames=("tile_n", "tile_bt"))
    # Smaller-than-default tiles here so the demo exercises a (2, 2) grid
    # (multiple steps along both the vertex and batch axes).
    out = fwd(x, index, itp_mat, weight, bias, tile_n=256, tile_bt=2)
    out = jax.block_until_ready(out)

    ref = sphere_conv_reference(x, index, itp_mat, weight, bias)
    assert out.shape == (B, T, N, O)
    assert jnp.allclose(out, ref, rtol=2e-3, atol=2e-3), float(jnp.abs(out - ref).max())
    print("KERNEL_OK")
</pallas_src>

<mosaic_0001>
module attributes {stable_mosaic.version = 11 : i64} {
  func.func @sphere_conv_kernel(%arg0: i32, %arg1: i32, %arg2: memref<2x7x4x256xf32, #tpu.memory_space<vmem>>, %arg3: memref<7x9x256xf32, #tpu.memory_space<vmem>>, %arg4: memref<4x8x9xf32, #tpu.memory_space<vmem>>, %arg5: memref<8x1xf32, #tpu.memory_space<vmem>>, %arg6: memref<2x8x256xf32, #tpu.memory_space<vmem>>) attributes {dimension_semantics = [#tpu.dimension_semantics<parallel>, #tpu.dimension_semantics<parallel>], iteration_bounds = array<i64: 2, 2>, scalar_prefetch = 0 : i64, scratch_operands = 0 : i64, tpu.core_type = #tpu.core_type<tc>, window_params = [{transform_indices = @transform_0, window_bounds = array<i64: 2, 7, 4, 256>}, {transform_indices = @transform_1, window_bounds = array<i64: 7, 9, 256>}, {pipeline_mode = #tpu.pipeline_mode<synchronous>, transform_indices = @transform_2, window_bounds = array<i64: 4, 8, 9>}, {pipeline_mode = #tpu.pipeline_mode<synchronous>, transform_indices = @transform_3, window_bounds = array<i64: 8, 1>}, {transform_indices = @transform_4, window_bounds = array<i64: 2, 8, 256>}]} {
    %c0 = arith.constant 0 : index
    %c0_0 = arith.constant 0 : index
    %0 = vector.load %arg5[%c0, %c0_0] : memref<8x1xf32, #tpu.memory_space<vmem>>, vector<8x1xf32>
    %c0_1 = arith.constant 0 : index
    %c0_2 = arith.constant 0 : index
    %c0_3 = arith.constant 0 : index
    %c0_4 = arith.constant 0 : index
    %1 = vector.load %arg2[%c0_1, %c0_2, %c0_3, %c0_4] : memref<2x7x4x256xf32, #tpu.memory_space<vmem>>, vector<1x1x4x256xf32>
    %2 = vector.shape_cast %1 : vector<1x1x4x256xf32> to vector<4x256xf32>
    %c0_5 = arith.constant 0 : index
    %c0_6 = arith.constant 0 : index
    %c0_7 = arith.constant 0 : index
    %3 = vector.load %arg3[%c0_5, %c0_6, %c0_7] : memref<7x9x256xf32, #tpu.memory_space<vmem>>, vector<1x9x256xf32>
    %4 = vector.shape_cast %3 : vector<1x9x256xf32> to vector<9x256xf32>
    %5 = vector.shape_cast %2 : vector<4x256xf32> to vector<4x1x256xf32>
    %6 = vector.shape_cast %4 : vector<9x256xf32> to vector<1x9x256xf32>
    %7 = vector.broadcast %5 : vector<4x1x256xf32> to vector<4x9x256xf32>
    %8 = vector.broadcast %6 : vector<1x9x256xf32> to vector<4x9x256xf32>
    %9 = arith.mulf %7, %8 : vector<4x9x256xf32>
    %c0_8 = arith.constant 0 : index
    %c1 = arith.constant 1 : index
    %c0_9 = arith.constant 0 : index
    %c0_10 = arith.constant 0 : index
    %10 = vector.load %arg2[%c0_8, %c1, %c0_9, %c0_10] : memref<2x7x4x256xf32, #tpu.memory_space<vmem>>, vector<1x1x4x256xf32>
    %11 = vector.shape_cast %10 : vector<1x1x4x256xf32> to vector<4x256xf32>
    %c1_11 = arith.constant 1 : index
    %c0_12 = arith.constant 0 : index
    %c0_13 = arith.constant 0 : index
    %12 = vector.load %arg3[%c1_11, %c0_12, %c0_13] : memref<7x9x256xf32, #tpu.memory_space<vmem>>, vector<1x9x256xf32>
    %13 = vector.shape_cast %12 : vector<1x9x256xf32> to vector<9x256xf32>
    %14 = vector.shape_cast %11 : vector<4x256xf32> to vector<4x1x256xf32>
    %15 = vector.shape_cast %13 : vector<9x256xf32> to vector<1x9x256xf32>
    %16 = vector.broadcast %14 : vector<4x1x256xf32> to vector<4x9x256xf32>
    %17 = vector.broadcast %15 : vector<1x9x256xf32> to vector<4x9x256xf32>
    %18 = arith.mulf %16, %17 : vector<4x9x256xf32>
    %19 = arith.addf %9, %18 : vector<4x9x256xf32>
    %c0_14 = arith.constant 0 : index
    %c2 = arith.constant 2 : index
    %c0_15 = arith.constant 0 : index
    %c0_16 = arith.constant 0 : index
    %20 = vector.load %arg2[%c0_14, %c2, %c0_15, %c0_16] : memref<2x7x4x256xf32, #tpu.memory_space<vmem>>, vector<1x1x4x256xf32>
    %21 = vector.shape_cast %20 : vector<1x1x4x256xf32> to vector<4x256xf32>
    %c2_17 = arith.constant 2 : index
    %c0_18 = arith.constant 0 : index
    %c0_19 = arith.constant 0 : index
    %22 = vector.load %arg3[%c2_17, %c0_18, %c0_19] : memref<7x9x256xf32, #tpu.memory_space<vmem>>, vector<1x9x256xf32>
    %23 = vector.shape_cast %22 : vector<1x9x256xf32> to vector<9x256xf32>
    %24 = vector.shape_cast %21 : vector<4x256xf32> to vector<4x1x256xf32>
    %25 = vector.shape_cast %23 : vector<9x256xf32> to vector<1x9x256xf32>
    %26 = vector.broadcast %24 : vector<4x1x256xf32> to vector<4x9x256xf32>
    %27 = vector.broadcast %25 : vector<1x9x256xf32> to vector<4x9x256xf32>
    %28 = arith.mulf %26, %27 : vector<4x9x256xf32>
    %29 = arith.addf %19, %28 : vector<4x9x256xf32>
    %c0_20 = arith.constant 0 : index
    %c3 = arith.constant 3 : index
    %c0_21 = arith.constant 0 : index
    %c0_22 = arith.constant 0 : index
    %30 = vector.load %arg2[%c0_20, %c3, %c0_21, %c0_22] : memref<2x7x4x256xf32, #tpu.memory_space<vmem>>, vector<1x1x4x256xf32>
    %31 = vector.shape_cast %30 : vector<1x1x4x256xf32> to vector<4x256xf32>
    %c3_23 = arith.constant 3 : index
    %c0_24 = arith.constant 0 : index
    %c0_25 = arith.constant 0 : index
    %32 = vector.load %arg3[%c3_23, %c0_24, %c0_25] : memref<7x9x256xf32, #tpu.memory_space<vmem>>, vector<1x9x256xf32>
    %33 = vector.shape_cast %32 : vector<1x9x256xf32> to vector<9x256xf32>
    %34 = vector.shape_cast %31 : vector<4x256xf32> to vector<4x1x256xf32>
    %35 = vector.shape_cast %33 : vector<9x256xf32> to vector<1x9x256xf32>
    %36 = vector.broadcast %34 : vector<4x1x256xf32> to vector<4x9x256xf32>
    %37 = vector.broadcast %35 : vector<1x9x256xf32> to vector<4x9x256xf32>
    %38 = arith.mulf %36, %37 : vector<4x9x256xf32>
    %39 = arith.addf %29, %38 : vector<4x9x256xf32>
    %c0_26 = arith.constant 0 : index
    %c4 = arith.constant 4 : index
    %c0_27 = arith.constant 0 : index
    %c0_28 = arith.constant 0 : index
    %40 = vector.load %arg2[%c0_26, %c4, %c0_27, %c0_28] : memref<2x7x4x256xf32, #tpu.memory_space<vmem>>, vector<1x1x4x256xf32>
    %41 = vector.shape_cast %40 : vector<1x1x4x256xf32> to vector<4x256xf32>
    %c4_29 = arith.constant 4 : index
    %c0_30 = arith.constant 0 : index
    %c0_31 = arith.constant 0 : index
    %42 = vector.load %arg3[%c4_29, %c0_30, %c0_31] : memref<7x9x256xf32, #tpu.memory_space<vmem>>, vector<1x9x256xf32>
    %43 = vector.shape_cast %42 : vector<1x9x256xf32> to vector<9x256xf32>
    %44 = vector.shape_cast %41 : vector<4x256xf32> to vector<4x1x256xf32>
    %45 = vector.shape_cast %43 : vector<9x256xf32> to vector<1x9x256xf32>
    %46 = vector.broadcast %44 : vector<4x1x256xf32> to vector<4x9x256xf32>
    %47 = vector.broadcast %45 : vector<1x9x256xf32> to vector<4x9x256xf32>
    %48 = arith.mulf %46, %47 : vector<4x9x256xf32>
    %49 = arith.addf %39, %48 : vector<4x9x256xf32>
    %c0_32 = arith.constant 0 : index
    %c5 = arith.constant 5 : index
    %c0_33 = arith.constant 0 : index
    %c0_34 = arith.constant 0 : index
    %50 = vector.load %arg2[%c0_32, %c5, %c0_33, %c0_34] : memref<2x7x4x256xf32, #tpu.memory_space<vmem>>, vector<1x1x4x256xf32>
    %51 = vector.shape_cast %50 : vector<1x1x4x256xf32> to vector<4x256xf32>
    %c5_35 = arith.constant 5 : index
    %c0_36 = arith.constant 0 : index
    %c0_37 = arith.constant 0 : index
    %52 = vector.load %arg3[%c5_35, %c0_36, %c0_37] : memref<7x9x256xf32, #tpu.memory_space<vmem>>, vector<1x9x256xf32>
    %53 = vector.shape_cast %52 : vector<1x9x256xf32> to vector<9x256xf32>
    %54 = vector.shape_cast %51 : vector<4x256xf32> to vector<4x1x256xf32>
    %55 = vector.shape_cast %53 : vector<9x256xf32> to vector<1x9x256xf32>
    %56 = vector.broadcast %54 : vector<4x1x256xf32> to vector<4x9x256xf32>
    %57 = vector.broadcast %55 : vector<1x9x256xf32> to vector<4x9x256xf32>
    %58 = arith.mulf %56, %57 : vector<4x9x256xf32>
    %59 = arith.addf %49, %58 : vector<4x9x256xf32>
    %c0_38 = arith.constant 0 : index
    %c6 = arith.constant 6 : index
    %c0_39 = arith.constant 0 : index
    %c0_40 = arith.constant 0 : index
    %60 = vector.load %arg2[%c0_38, %c6, %c0_39, %c0_40] : memref<2x7x4x256xf32, #tpu.memory_space<vmem>>, vector<1x1x4x256xf32>
    %61 = vector.shape_cast %60 : vector<1x1x4x256xf32> to vector<4x256xf32>
    %c6_41 = arith.constant 6 : index
    %c0_42 = arith.constant 0 : index
    %c0_43 = arith.constant 0 : index
    %62 = vector.load %arg3[%c6_41, %c0_42, %c0_43] : memref<7x9x256xf32, #tpu.memory_space<vmem>>, vector<1x9x256xf32>
    %63 = vector.shape_cast %62 : vector<1x9x256xf32> to vector<9x256xf32>
    %64 = vector.shape_cast %61 : vector<4x256xf32> to vector<4x1x256xf32>
    %65 = vector.shape_cast %63 : vector<9x256xf32> to vector<1x9x256xf32>
    %66 = vector.broadcast %64 : vector<4x1x256xf32> to vector<4x9x256xf32>
    %67 = vector.broadcast %65 : vector<1x9x256xf32> to vector<4x9x256xf32>
    %68 = arith.mulf %66, %67 : vector<4x9x256xf32>
    %69 = arith.addf %59, %68 : vector<4x9x256xf32>
    %c0_44 = arith.constant 0 : index
    %c0_45 = arith.constant 0 : index
    %c0_46 = arith.constant 0 : index
    %70 = vector.load %arg4[%c0_44, %c0_45, %c0_46] : memref<4x8x9xf32, #tpu.memory_space<vmem>>, vector<1x8x9xf32>
    %71 = vector.shape_cast %70 : vector<1x8x9xf32> to vector<8x9xf32>
    %72 = vector.extract_strided_slice %69 {offsets = [0, 0, 0], sizes = [1, 9, 256], strides = [1, 1, 1]} : vector<4x9x256xf32> to vector<1x9x256xf32>
    %73 = vector.shape_cast %72 : vector<1x9x256xf32> to vector<9x256xf32>
    %cst = arith.constant dense<0.000000e+00> : vector<8x256xf32>
    %74 = tpu.matmul %71, %73, %cst {dimension_numbers = #tpu.dot_dimension_numbers<[1], [0], [0], [1], [0, 0, 1, 1], [], []>} : vector<8x9xf32>, vector<9x256xf32>, vector<8x256xf32> -> vector<8x256xf32>
    %c1_47 = arith.constant 1 : index
    %c0_48 = arith.constant 0 : index
    %c0_49 = arith.constant 0 : index
    %75 = vector.load %arg4[%c1_47, %c0_48, %c0_49] : memref<4x8x9xf32, #tpu.memory_space<vmem>>, vector<1x8x9xf32>
    %76 = vector.shape_cast %75 : vector<1x8x9xf32> to vector<8x9xf32>
    %77 = vector.extract_strided_slice %69 {offsets = [1, 0, 0], sizes = [1, 9, 256], strides = [1, 1, 1]} : vector<4x9x256xf32> to vector<1x9x256xf32>
    %78 = vector.shape_cast %77 : vector<1x9x256xf32> to vector<9x256xf32>
    %cst_50 = arith.constant dense<0.000000e+00> : vector<8x256xf32>
    %79 = tpu.matmul %76, %78, %cst_50 {dimension_numbers = #tpu.dot_dimension_numbers<[1], [0], [0], [1], [0, 0, 1, 1], [], []>} : vector<8x9xf32>, vector<9x256xf32>, vector<8x256xf32> -> vector<8x256xf32>
    %80 = arith.addf %74, %79 : vector<8x256xf32>
    %c2_51 = arith.constant 2 : index
    %c0_52 = arith.constant 0 : index
    %c0_53 = arith.constant 0 : index
    %81 = vector.load %arg4[%c2_51, %c0_52, %c0_53] : memref<4x8x9xf32, #tpu.memory_space<vmem>>, vector<1x8x9xf32>
    %82 = vector.shape_cast %81 : vector<1x8x9xf32> to vector<8x9xf32>
    %83 = vector.extract_strided_slice %69 {offsets = [2, 0, 0], sizes = [1, 9, 256], strides = [1, 1, 1]} : vector<4x9x256xf32> to vector<1x9x256xf32>
    %84 = vector.shape_cast %83 : vector<1x9x256xf32> to vector<9x256xf32>
    %cst_54 = arith.constant dense<0.000000e+00> : vector<8x256xf32>
    %85 = tpu.matmul %82, %84, %cst_54 {dimension_numbers = #tpu.dot_dimension_numbers<[1], [0], [0], [1], [0, 0, 1, 1], [], []>} : vector<8x9xf32>, vector<9x256xf32>, vector<8x256xf32> -> vector<8x256xf32>
    %86 = arith.addf %80, %85 : vector<8x256xf32>
    %c3_55 = arith.constant 3 : index
    %c0_56 = arith.constant 0 : index
    %c0_57 = arith.constant 0 : index
    %87 = vector.load %arg4[%c3_55, %c0_56, %c0_57] : memref<4x8x9xf32, #tpu.memory_space<vmem>>, vector<1x8x9xf32>
    %88 = vector.shape_cast %87 : vector<1x8x9xf32> to vector<8x9xf32>
    %89 = vector.extract_strided_slice %69 {offsets = [3, 0, 0], sizes = [1, 9, 256], strides = [1, 1, 1]} : vector<4x9x256xf32> to vector<1x9x256xf32>
    %90 = vector.shape_cast %89 : vector<1x9x256xf32> to vector<9x256xf32>
    %cst_58 = arith.constant dense<0.000000e+00> : vector<8x256xf32>
    %91 = tpu.matmul %88, %90, %cst_58 {dimension_numbers = #tpu.dot_dimension_numbers<[1], [0], [0], [1], [0, 0, 1, 1], [], []>} : vector<8x9xf32>, vector<9x256xf32>, vector<8x256xf32> -> vector<8x256xf32>
    %92 = arith.addf %86, %91 : vector<8x256xf32>
    %93 = vector.broadcast %0 : vector<8x1xf32> to vector<8x256xf32>
    %94 = arith.addf %92, %93 : vector<8x256xf32>
    %c0_59 = arith.constant 0 : index
    %c0_60 = arith.constant 0 : index
    %c0_61 = arith.constant 0 : index
    %95 = vector.load %arg6[%c0_59, %c0_60, %c0_61] : memref<2x8x256xf32, #tpu.memory_space<vmem>>, vector<1x8x256xf32>
    %96 = vector.shape_cast %95 : vector<1x8x256xf32> to vector<8x256xf32>
    %97 = vector.shape_cast %94 : vector<8x256xf32> to vector<1x8x256xf32>
    tpu.vector_store %arg6[%c0_59, %c0_60, %c0_61], %97 {strides = array<i32>} : memref<2x8x256xf32, #tpu.memory_space<vmem>>, vector<1x8x256xf32>,
    %c1_62 = arith.constant 1 : index
    %c0_63 = arith.constant 0 : index
    %c0_64 = arith.constant 0 : index
    %c0_65 = arith.constant 0 : index
    %98 = vector.load %arg2[%c1_62, %c0_63, %c0_64, %c0_65] : memref<2x7x4x256xf32, #tpu.memory_space<vmem>>, vector<1x1x4x256xf32>
    %99 = vector.shape_cast %98 : vector<1x1x4x256xf32> to vector<4x256xf32>
    %c0_66 = arith.constant 0 : index
    %c0_67 = arith.constant 0 : index
    %c0_68 = arith.constant 0 : index
    %100 = vector.load %arg3[%c0_66, %c0_67, %c0_68] : memref<7x9x256xf32, #tpu.memory_space<vmem>>, vector<1x9x256xf32>
    %101 = vector.shape_cast %100 : vector<1x9x256xf32> to vector<9x256xf32>
    %102 = vector.shape_cast %99 : vector<4x256xf32> to vector<4x1x256xf32>
    %103 = vector.shape_cast %101 : vector<9x256xf32> to vector<1x9x256xf32>
    %104 = vector.broadcast %102 : vector<4x1x256xf32> to vector<4x9x256xf32>
    %105 = vector.broadcast %103 : vector<1x9x256xf32> to vector<4x9x256xf32>
    %106 = arith.mulf %104, %105 : vector<4x9x256xf32>
    %c1_69 = arith.constant 1 : index
    %c1_70 = arith.constant 1 : index
    %c0_71 = arith.constant 0 : index
    %c0_72 = arith.constant 0 : index
    %107 = vector.load %arg2[%c1_69, %c1_70, %c0_71, %c0_72] : memref<2x7x4x256xf32, #tpu.memory_space<vmem>>, vector<1x1x4x256xf32>
    %108 = vector.shape_cast %107 : vector<1x1x4x256xf32> to vector<4x256xf32>
    %c1_73 = arith.constant 1 : index
    %c0_74 = arith.constant 0 : index
    %c0_75 = arith.constant 0 : index
    %109 = vector.load %arg3[%c1_73, %c0_74, %c0_75] : memref<7x9x256xf32, #tpu.memory_space<vmem>>, vector<1x9x256xf32>
    %110 = vector.shape_cast %109 : vector<1x9x256xf32> to vector<9x256xf32>
    %111 = vector.shape_cast %108 : vector<4x256xf32> to vector<4x1x256xf32>
    %112 = vector.shape_cast %110 : vector<9x256xf32> to vector<1x9x256xf32>
    %113 = vector.broadcast %111 : vector<4x1x256xf32> to vector<4x9x256xf32>
    %114 = vector.broadcast %112 : vector<1x9x256xf32> to vector<4x9x256xf32>
    %115 = arith.mulf %113, %114 : vector<4x9x256xf32>
    %116 = arith.addf %106, %115 : vector<4x9x256xf32>
    %c1_76 = arith.constant 1 : index
    %c2_77 = arith.constant 2 : index
    %c0_78 = arith.constant 0 : index
    %c0_79 = arith.constant 0 : index
    %117 = vector.load %arg2[%c1_76, %c2_77, %c0_78, %c0_79] : memref<2x7x4x256xf32, #tpu.memory_space<vmem>>, vector<1x1x4x256xf32>
    %118 = vector.shape_cast %117 : vector<1x1x4x256xf32> to vector<4x256xf32>
    %c2_80 = arith.constant 2 : index
    %c0_81 = arith.constant 0 : index
    %c0_82 = arith.constant 0 : index
    %119 = vector.load %arg3[%c2_80, %c0_81, %c0_82] : memref<7x9x256xf32, #tpu.memory_space<vmem>>, vector<1x9x256xf32>
    %120 = vector.shape_cast %119 : vector<1x9x256xf32> to vector<9x256xf32>
    %121 = vector.shape_cast %118 : vector<4x256xf32> to vector<4x1x256xf32>
    %122 = vector.shape_cast %120 : vector<9x256xf32> to vector<1x9x256xf32>
    %123 = vector.broadcast %121 : vector<4x1x256xf32> to vector<4x9x256xf32>
    %124 = vector.broadcast %122 : vector<1x9x256xf32> to vector<4x9x256xf32>
    %125 = arith.mulf %123, %124 : vector<4x9x256xf32>
    %126 = arith.addf %116, %125 : vector<4x9x256xf32>
    %c1_83 = arith.constant 1 : index
    %c3_84 = arith.constant 3 : index
    %c0_85 = arith.constant 0 : index
    %c0_86 = arith.constant 0 : index
    %127 = vector.load %arg2[%c1_83, %c3_84, %c0_85, %c0_86] : memref<2x7x4x256xf32, #tpu.memory_space<vmem>>, vector<1x1x4x256xf32>
    %128 = vector.shape_cast %127 : vector<1x1x4x256xf32> to vector<4x256xf32>
    %c3_87 = arith.constant 3 : index
    %c0_88 = arith.constant 0 : index
    %c0_89 = arith.constant 0 : index
    %129 = vector.load %arg3[%c3_87, %c0_88, %c0_89] : memref<7x9x256xf32, #tpu.memory_space<vmem>>, vector<1x9x256xf32>
    %130 = vector.shape_cast %129 : vector<1x9x256xf32> to vector<9x256xf32>
    %131 = vector.shape_cast %128 : vector<4x256xf32> to vector<4x1x256xf32>
    %132 = vector.shape_cast %130 : vector<9x256xf32> to vector<1x9x256xf32>
    %133 = vector.broadcast %131 : vector<4x1x256xf32> to vector<4x9x256xf32>
    %134 = vector.broadcast %132 : vector<1x9x256xf32> to vector<4x9x256xf32>
    %135 = arith.mulf %133, %134 : vector<4x9x256xf32>
    %136 = arith.addf %126, %135 : vector<4x9x256xf32>
    %c1_90 = arith.constant 1 : index
    %c4_91 = arith.constant 4 : index
    %c0_92 = arith.constant 0 : index
    %c0_93 = arith.constant 0 : index
    %137 = vector.load %arg2[%c1_90, %c4_91, %c0_92, %c0_93] : memref<2x7x4x256xf32, #tpu.memory_space<vmem>>, vector<1x1x4x256xf32>
    %138 = vector.shape_cast %137 : vector<1x1x4x256xf32> to vector<4x256xf32>
    %c4_94 = arith.constant 4 : index
    %c0_95 = arith.constant 0 : index
    %c0_96 = arith.constant 0 : index
    %139 = vector.load %arg3[%c4_94, %c0_95, %c0_96] : memref<7x9x256xf32, #tpu.memory_space<vmem>>, vector<1x9x256xf32>
    %140 = vector.shape_cast %139 : vector<1x9x256xf32> to vector<9x256xf32>
    %141 = vector.shape_cast %138 : vector<4x256xf32> to vector<4x1x256xf32>
    %142 = vector.shape_cast %140 : vector<9x256xf32> to vector<1x9x256xf32>
    %143 = vector.broadcast %141 : vector<4x1x256xf32> to vector<4x9x256xf32>
    %144 = vector.broadcast %142 : vector<1x9x256xf32> to vector<4x9x256xf32>
    %145 = arith.mulf %143, %144 : vector<4x9x256xf32>
    %146 = arith.addf %136, %145 : vector<4x9x256xf32>
    %c1_97 = arith.constant 1 : index
    %c5_98 = arith.constant 5 : index
    %c0_99 = arith.constant 0 : index
    %c0_100 = arith.constant 0 : index
    %147 = vector.load %arg2[%c1_97, %c5_98, %c0_99, %c0_100] : memref<2x7x4x256xf32, #tpu.memory_space<vmem>>, vector<1x1x4x256xf32>
    %148 = vector.shape_cast %147 : vector<1x1x4x256xf32> to vector<4x256xf32>
    %c5_101 = arith.constant 5 : index
    %c0_102 = arith.constant 0 : index
    %c0_103 = arith.constant 0 : index
    %149 = vector.load %arg3[%c5_101, %c0_102, %c0_103] : memref<7x9x256xf32, #tpu.memory_space<vmem>>, vector<1x9x256xf32>
    %150 = vector.shape_cast %149 : vector<1x9x256xf32> to vector<9x256xf32>
    %151 = vector.shape_cast %148 : vector<4x256xf32> to vector<4x1x256xf32>
    %152 = vector.shape_cast %150 : vector<9x256xf32> to vector<1x9x256xf32>
    %153 = vector.broadcast %151 : vector<4x1x256xf32> to vector<4x9x256xf32>
    %154 = vector.broadcast %152 : vector<1x9x256xf32> to vector<4x9x256xf32>
    %155 = arith.mulf %153, %154 : vector<4x9x256xf32>
    %156 = arith.addf %146, %155 : vector<4x9x256xf32>
    %c1_104 = arith.constant 1 : index
    %c6_105 = arith.constant 6 : index
    %c0_106 = arith.constant 0 : index
    %c0_107 = arith.constant 0 : index
    %157 = vector.load %arg2[%c1_104, %c6_105, %c0_106, %c0_107] : memref<2x7x4x256xf32, #tpu.memory_space<vmem>>, vector<1x1x4x256xf32>
    %158 = vector.shape_cast %157 : vector<1x1x4x256xf32> to vector<4x256xf32>
    %c6_108 = arith.constant 6 : index
    %c0_109 = arith.constant 0 : index
    %c0_110 = arith.constant 0 : index
    %159 = vector.load %arg3[%c6_108, %c0_109, %c0_110] : memref<7x9x256xf32, #tpu.memory_space<vmem>>, vector<1x9x256xf32>
    %160 = vector.shape_cast %159 : vector<1x9x256xf32> to vector<9x256xf32>
    %161 = vector.shape_cast %158 : vector<4x256xf32> to vector<4x1x256xf32>
    %162 = vector.shape_cast %160 : vector<9x256xf32> to vector<1x9x256xf32>
    %163 = vector.broadcast %161 : vector<4x1x256xf32> to vector<4x9x256xf32>
    %164 = vector.broadcast %162 : vector<1x9x256xf32> to vector<4x9x256xf32>
    %165 = arith.mulf %163, %164 : vector<4x9x256xf32>
    %166 = arith.addf %156, %165 : vector<4x9x256xf32>
    %c0_111 = arith.constant 0 : index
    %c0_112 = arith.constant 0 : index
    %c0_113 = arith.constant 0 : index
    %167 = vector.load %arg4[%c0_111, %c0_112, %c0_113] : memref<4x8x9xf32, #tpu.memory_space<vmem>>, vector<1x8x9xf32>
    %168 = vector.shape_cast %167 : vector<1x8x9xf32> to vector<8x9xf32>
    %169 = vector.extract_strided_slice %166 {offsets = [0, 0, 0], sizes = [1, 9, 256], strides = [1, 1, 1]} : vector<4x9x256xf32> to vector<1x9x256xf32>
    %170 = vector.shape_cast %169 : vector<1x9x256xf32> to vector<9x256xf32>
    %cst_114 = arith.constant dense<0.000000e+00> : vector<8x256xf32>
    %171 = tpu.matmul %168, %170, %cst_114 {dimension_numbers = #tpu.dot_dimension_numbers<[1], [0], [0], [1], [0, 0, 1, 1], [], []>} : vector<8x9xf32>, vector<9x256xf32>, vector<8x256xf32> -> vector<8x256xf32>
    %c1_115 = arith.constant 1 : index
    %c0_116 = arith.constant 0 : index
    %c0_117 = arith.constant 0 : index
    %172 = vector.load %arg4[%c1_115, %c0_116, %c0_117] : memref<4x8x9xf32, #tpu.memory_space<vmem>>, vector<1x8x9xf32>
    %173 = vector.shape_cast %172 : vector<1x8x9xf32> to vector<8x9xf32>
    %174 = vector.extract_strided_slice %166 {offsets = [1, 0, 0], sizes = [1, 9, 256], strides = [1, 1, 1]} : vector<4x9x256xf32> to vector<1x9x256xf32>
    %175 = vector.shape_cast %174 : vector<1x9x256xf32> to vector<9x256xf32>
    %cst_118 = arith.constant dense<0.000000e+00> : vector<8x256xf32>
    %176 = tpu.matmul %173, %175, %cst_118 {dimension_numbers = #tpu.dot_dimension_numbers<[1], [0], [0], [1], [0, 0, 1, 1], [], []>} : vector<8x9xf32>, vector<9x256xf32>, vector<8x256xf32> -> vector<8x256xf32>
    %177 = arith.addf %171, %176 : vector<8x256xf32>
    %c2_119 = arith.constant 2 : index
    %c0_120 = arith.constant 0 : index
    %c0_121 = arith.constant 0 : index
    %178 = vector.load %arg4[%c2_119, %c0_120, %c0_121] : memref<4x8x9xf32, #tpu.memory_space<vmem>>, vector<1x8x9xf32>
    %179 = vector.shape_cast %178 : vector<1x8x9xf32> to vector<8x9xf32>
    %180 = vector.extract_strided_slice %166 {offsets = [2, 0, 0], sizes = [1, 9, 256], strides = [1, 1, 1]} : vector<4x9x256xf32> to vector<1x9x256xf32>
    %181 = vector.shape_cast %180 : vector<1x9x256xf32> to vector<9x256xf32>
    %cst_122 = arith.constant dense<0.000000e+00> : vector<8x256xf32>
    %182 = tpu.matmul %179, %181, %cst_122 {dimension_numbers = #tpu.dot_dimension_numbers<[1], [0], [0], [1], [0, 0, 1, 1], [], []>} : vector<8x9xf32>, vector<9x256xf32>, vector<8x256xf32> -> vector<8x256xf32>
    %183 = arith.addf %177, %182 : vector<8x256xf32>
    %c3_123 = arith.constant 3 : index
    %c0_124 = arith.constant 0 : index
    %c0_125 = arith.constant 0 : index
    %184 = vector.load %arg4[%c3_123, %c0_124, %c0_125] : memref<4x8x9xf32, #tpu.memory_space<vmem>>, vector<1x8x9xf32>
    %185 = vector.shape_cast %184 : vector<1x8x9xf32> to vector<8x9xf32>
    %186 = vector.extract_strided_slice %166 {offsets = [3, 0, 0], sizes = [1, 9, 256], strides = [1, 1, 1]} : vector<4x9x256xf32> to vector<1x9x256xf32>
    %187 = vector.shape_cast %186 : vector<1x9x256xf32> to vector<9x256xf32>
    %cst_126 = arith.constant dense<0.000000e+00> : vector<8x256xf32>
    %188 = tpu.matmul %185, %187, %cst_126 {dimension_numbers = #tpu.dot_dimension_numbers<[1], [0], [0], [1], [0, 0, 1, 1], [], []>} : vector<8x9xf32>, vector<9x256xf32>, vector<8x256xf32> -> vector<8x256xf32>
    %189 = arith.addf %183, %188 : vector<8x256xf32>
    %190 = vector.broadcast %0 : vector<8x1xf32> to vector<8x256xf32>
    %191 = arith.addf %189, %190 : vector<8x256xf32>
    %c1_127 = arith.constant 1 : index
    %c0_128 = arith.constant 0 : index
    %c0_129 = arith.constant 0 : index
    %192 = vector.load %arg6[%c1_127, %c0_128, %c0_129] : memref<2x8x256xf32, #tpu.memory_space<vmem>>, vector<1x8x256xf32>
    %193 = vector.shape_cast %192 : vector<1x8x256xf32> to vector<8x256xf32>
    %194 = vector.shape_cast %191 : vector<8x256xf32> to vector<1x8x256xf32>
    tpu.vector_store %arg6[%c1_127, %c0_128, %c0_129], %194 {strides = array<i32>} : memref<2x8x256xf32, #tpu.memory_space<vmem>>, vector<1x8x256xf32>,
    return
  }
  func.func @transform_0(%arg0: i32, %arg1: i32) -> (i32, i32, i32, i32) {
    %c0_i32 = arith.constant 0 : i32
    %c0_i32_0 = arith.constant 0 : i32
    %c0_i32_1 = arith.constant 0 : i32
    return %arg1, %c0_i32, %c0_i32_0, %arg0 : i32, i32, i32, i32
  }
  func.func @transform_1(%arg0: i32, %arg1: i32) -> (i32, i32, i32) {
    %c0_i32 = arith.constant 0 : i32
    %c0_i32_0 = arith.constant 0 : i32
    %c0_i32_1 = arith.constant 0 : i32
    return %c0_i32, %c0_i32_0, %arg0 : i32, i32, i32
  }
  func.func @transform_2(%arg0: i32, %arg1: i32) -> (i32, i32, i32) {
    %c0_i32 = arith.constant 0 : i32
    %c0_i32_0 = arith.constant 0 : i32
    %c0_i32_1 = arith.constant 0 : i32
    %c0_i32_2 = arith.constant 0 : i32
    return %c0_i32, %c0_i32_0, %c0_i32_1 : i32, i32, i32
  }
  func.func @transform_3(%arg0: i32, %arg1: i32) -> (i32, i32) {
    %c0_i32 = arith.constant 0 : i32
    %c0_i32_0 = arith.constant 0 : i32
    %c0_i32_1 = arith.constant 0 : i32
    return %c0_i32, %c0_i32_0 : i32, i32
  }
  func.func @transform_4(%arg0: i32, %arg1: i32) -> (i32, i32, i32) {
    %c0_i32 = arith.constant 0 : i32
    %c0_i32_0 = arith.constant 0 : i32
    return %arg1, %c0_i32, %arg0 : i32, i32, i32
  }
}

</mosaic_0001>

<llo_original>
// kernel: sphere_conv_forward.1
$region0: #{sphere_conv_forward.1}
  #allocation0 [shape = 'u32[]', space=smem, size = 0x4, offset = 0x4, fixed_abs, tag = 'smem constant byte address 0x4 - core index']
  #allocation1 [shape = 'u32[144,128]{1,0:T(1,128)}', space=vmem, size = 0x12000, scoped, tag = 'internal scratch']
  %s0 = inlined_call_operand.vmem [shape: f32[4,7,4,512], index: 0, kind: input, shape index: {}]
  %s1 = inlined_call_operand.vmem [shape: f32[7,9,512], index: 1, kind: input, shape index: {}]
  %s2 = inlined_call_operand.vmem [shape: f32[4,8,9], index: 2, kind: input, shape index: {}]
  %s3 = inlined_call_operand.vmem [shape: f32[8,1], index: 3, kind: input, shape index: {}]
  %s4 = inlined_call_operand.hbm [shape: f32[4,8,512], index: 4, kind: output, shape index: {}]
  %s5 = sld [smem:[#allocation0]]
  $region110: #{sphere_conv_forward.1} parent=0
    _
  %s7 = ssub.s32 1, %s5
  %s8 = scalar_select 0, %s7, %s5
  $region1: #{sphere_conv_forward.1} parent=0
    #allocation2 [shape = 'u8[114688]{0}', space=vmem, size = 0x1c000, scoped, tag = 'input window, operand 0']
    #allocation3 [shape = 'u8[229376]{0}', space=vmem, size = 0x38000, scoped, tag = 'input window, operand 1']
    #allocation4 [shape = 'u8[32768]{0}', space=vmem, size = 0x8000, scoped, tag = 'output window, operand 0']
    #allocation5 [shape = 's32[2]{0}', space=sflag, size = 0x8, scoped, tag = 'scoped memory for sphere_conv_forward.1']
    %9 = vsyncpa [#allocation5], 0
    %s10 = scalar_lea.sflag [#allocation5], 1
    %11 = vsyncpa %s10, 0
    loop: start=0, step=1, limit=6
    $region2: #{sphere_conv_forward.1} parent=1 // loop_pre_header
      _
    $region3: #{sphere_conv_forward.1} parent=1 // loop_header
      %s13 = sphi 0, %s17
      %p14 = scmp.ge.s32.totalorder %s13, 6
      %s20 = sphi 0, %s32
      %s21 = sphi 0, %s28
      %s22 = sphi 0, %s20
      %s23 = sphi 0, %s21
      %s24 = sphi 0, %s22
      %s25 = sphi 0, %s23
      %s37 = sphi 0, %s39
      %s40 = sphi 0, %s37
      %s41 = sphi 0, %s40
      %s57 = sphi 0, %s41
      %s63 = sphi 0, %s65
      %s66 = sphi 0, %s63
      %s67 = sphi 0, %s66
      %s83 = sphi 0, %s67
      %s87 = sphi 0, %s87
      %s89 = sphi 0, %s87
      %s90 = sphi 0, %s89
      %s104 = sphi 0, %s90
      %s108 = sphi 0, %s108
      %s110 = sphi 0, %s108
      %s111 = sphi 0, %s110
      %s125 = sphi 0, %s111
      %s133 = sphi 0, %s135
      %s136 = sphi 0, %s133
      %s137 = sphi 0, %s136
      %s153 = sphi 0, %s137
    $region4: #{sphere_conv_forward.1} parent=1 // loop_header_branch
      %16 = sbr.rel (%p14) target = $region8
    $region5: #{sphere_conv_forward.1} parent=1 // loop_body
      %s18 = ssub.s32 %s13, 1
      %s19 = ssub.s32 %s13, 2
      %s26 = sadd.s32 1, %s21
      %p27 = scmp.ge.s32.totalorder %s26, 2
      %s28 = scalar_select %p27, 0, %s26
      %s29 = sadd.s32 1, %s20
      %s30 = scalar_select %p27, %s29, %s20
      %p31 = scmp.ge.s32.totalorder %s30, 2
      %s32 = scalar_select %p31, 0, %s30
      %s33 = ssub.s32 %s21, %s28
      %s34 = ssub.s32 %s20, %s32
      %s35 = sor.u32 %s33, %s34
      %p36 = scmp.eq.s32.totalorder %s35, 0
      %s38 = sadd.s32 %s37, 1
      %s39 = scalar_select %p36, %s37, %s38
      %p42 = pneg %p36
      %p43 = scmp.eq.s32.totalorder %s13, 3
      %p44 = por %p42, %p43
      %p45 = scmp.ne.s32.totalorder %s37, %s40
      %p46 = scmp.eq.s32.totalorder %s13, 0
      %p47 = por %p45, %p46
      %p48 = scmp.ne.s32.totalorder %s37, %s40
      %p49 = scmp.eq.s32.totalorder %s18, 3
      %p50 = por %p48, %p49
      %p51 = scmp.ne.s32.totalorder %s40, %s41
      %p52 = scmp.eq.s32.totalorder %s18, 0
      %p53 = por %p51, %p52
      %p54 = scmp.ne.s32.totalorder %s40, %s41
      %p55 = scmp.eq.s32.totalorder %s19, 3
      %p56 = por %p54, %p55
      %p58 = scmp.ne.s32.totalorder %s41, %s57
      %p59 = scmp.eq.s32.totalorder %s19, 0
      %p60 = por %p58, %p59
      %s61 = ssub.s32 %s20, %s32
      %p62 = scmp.eq.s32.totalorder %s61, 0
      %s64 = sadd.s32 %s63, 1
      %s65 = scalar_select %p62, %s63, %s64
      %p68 = pneg %p62
      %p69 = scmp.eq.s32.totalorder %s13, 3
      %p70 = por %p68, %p69
      %p71 = scmp.ne.s32.totalorder %s63, %s66
      %p72 = scmp.eq.s32.totalorder %s13, 0
      %p73 = por %p71, %p72
      %p74 = scmp.ne.s32.totalorder %s63, %s66
      %p75 = scmp.eq.s32.totalorder %s18, 3
      %p76 = por %p74, %p75
      %p77 = scmp.ne.s32.totalorder %s66, %s67
      %p78 = scmp.eq.s32.totalorder %s18, 0
      %p79 = por %p77, %p78
      %p80 = scmp.ne.s32.totalorder %s66, %s67
      %p81 = scmp.eq.s32.totalorder %s19, 3
      %p82 = por %p80, %p81
      %p84 = scmp.ne.s32.totalorder %s67, %s83
      %p85 = scmp.eq.s32.totalorder %s19, 0
      %p86 = por %p84, %p85
      %s88 = sadd.s32 %s87, 1
      %p91 = scmp.eq.s32.totalorder %s13, 3
      %p92 = scmp.ne.s32.totalorder %s87, %s89
      %p93 = scmp.eq.s32.totalorder %s13, 0
      %p94 = por %p92, %p93
      %p95 = scmp.ne.s32.totalorder %s87, %s89
      %p96 = scmp.eq.s32.totalorder %s18, 3
      %p97 = por %p95, %p96
      %p98 = scmp.ne.s32.totalorder %s89, %s90
      %p99 = scmp.eq.s32.totalorder %s18, 0
      %p100 = por %p98, %p99
      %p101 = scmp.ne.s32.totalorder %s89, %s90
      %p102 = scmp.eq.s32.totalorder %s19, 3
      %p103 = por %p101, %p102
      %p105 = scmp.ne.s32.totalorder %s90, %s104
      %p106 = scmp.eq.s32.totalorder %s19, 0
      %p107 = por %p105, %p106
      %s109 = sadd.s32 %s108, 1
      %p112 = scmp.eq.s32.totalorder %s13, 3
      %p113 = scmp.ne.s32.totalorder %s108, %s110
      %p114 = scmp.eq.s32.totalorder %s13, 0
      %p115 = por %p113, %p114
      %p116 = scmp.ne.s32.totalorder %s108, %s110
      %p117 = scmp.eq.s32.totalorder %s18, 3
      %p118 = por %p116, %p117
      %p119 = scmp.ne.s32.totalorder %s110, %s111
      %p120 = scmp.eq.s32.totalorder %s18, 0
      %p121 = por %p119, %p120
      %p122 = scmp.ne.s32.totalorder %s110, %s111
      %p123 = scmp.eq.s32.totalorder %s19, 3
      %p124 = por %p122, %p123
      %p126 = scmp.ne.s32.totalorder %s111, %s125
      %p127 = scmp.eq.s32.totalorder %s19, 0
      %p128 = por %p126, %p127
      %s129 = ssub.s32 %s21, %s28
      %s130 = ssub.s32 %s20, %s32
      %s131 = sor.u32 %s129, %s130
      %p132 = scmp.eq.s32.totalorder %s131, 0
      %s134 = sadd.s32 %s133, 1
      %s135 = scalar_select %p132, %s133, %s134
      %p138 = pneg %p132
      %p139 = scmp.eq.s32.totalorder %s13, 3
      %p140 = por %p138, %p139
      %p141 = scmp.ne.s32.totalorder %s133, %s136
      %p142 = scmp.eq.s32.totalorder %s13, 0
      %p143 = por %p141, %p142
      %p144 = scmp.ne.s32.totalorder %s133, %s136
      %p145 = scmp.eq.s32.totalorder %s18, 3
      %p146 = por %p144, %p145
      %p147 = scmp.ne.s32.totalorder %s136, %s137
      %p148 = scmp.eq.s32.totalorder %s18, 0
      %p149 = por %p147, %p148
      %p150 = scmp.ne.s32.totalorder %s136, %s137
      %p151 = scmp.eq.s32.totalorder %s19, 3
      %p152 = por %p150, %p151
      %p154 = scmp.ne.s32.totalorder %s137, %s153
      %p155 = scmp.eq.s32.totalorder %s19, 0
      %p156 = por %p154, %p155
      %p157 = scmp.le.s32.totalorder 1, %s13
      %p158 = scmp.lt.s32.totalorder %s13, 5
      %p159 = pnand %p157, %p158
      %p160 = pneg %p159
      // Predicated region
      $region9: #{sphere_conv_forward.1} parent=5 // pred_check
        _
      $region10: #{sphere_conv_forward.1} parent=5 // pred_check_branch
        %162 = sbr.rel (%p159) target = $region12
      $region11: #{sphere_conv_forward.1} parent=5 // pred_region
        %s163 = ssub.s32 %s13, 1
        // Predicated region
        $region13: #{sphere_conv_forward.1} parent=11 // pred_check
          %p164 = pneg %p100
        $region14: #{sphere_conv_forward.1} parent=11 // pred_check_branch
          %166 = sbr.rel (%p164) target = $region16
        $region15: #{sphere_conv_forward.1} parent=11 // pred_region
          _
        $region16: #{sphere_conv_forward.1} parent=11 // pred_fallthru
          _
        // Predicated region
        $region17: #{sphere_conv_forward.1} parent=11 // pred_check
          %p167 = pneg %p121
        $region18: #{sphere_conv_forward.1} parent=11 // pred_check_branch
          %169 = sbr.rel (%p167) target = $region20
        $region19: #{sphere_conv_forward.1} parent=11 // pred_region
          _
        $region20: #{sphere_conv_forward.1} parent=11 // pred_fallthru
          _
      $region12: #{sphere_conv_forward.1} parent=5 // pred_fallthru
        _
      %p170 = scmp.lt.s32.totalorder %s13, 4
      // Predicated region
      $region21: #{sphere_conv_forward.1} parent=5 // pred_check
        %p171 = pneg %p170
      $region22: #{sphere_conv_forward.1} parent=5 // pred_check_branch
        %173 = sbr.rel (%p171) target = $region24
      $region23: #{sphere_conv_forward.1} parent=5 // pred_region
        // Predicated region
        $region25: #{sphere_conv_forward.1} parent=23 // pred_check
          %p174 = pneg %p47
        $region26: #{sphere_conv_forward.1} parent=23 // pred_check_branch
          %176 = sbr.rel (%p174) target = $region28
        $region27: #{sphere_conv_forward.1} parent=23 // pred_region
          %s177 = sand.u32 %s37, 1
          %s178 = sand.u32 %s37, 1
          %s179 = smul.addr %s178, 112
          %s180 = scalar_lea.vmem [#allocation2], %s179
          %s181 = smul.u32 2, %s21
          %s182 = smul.u32 2, %s20
          %s183 = smul.addr %s181, 28
          %s184 = sadd.s32 %s182, %s183
          %s185 = smul.addr %s184, 4
          %s186 = scalar_lea.vmem %s0, %s185
          // Predicated region
          $region29: #{sphere_conv_forward.1} parent=27 // pred_check
            _
          $region30: #{sphere_conv_forward.1} parent=27 // pred_check_branch
            %188 = sbr.rel (0) target = $region32
          $region31: #{sphere_conv_forward.1} parent=27 // pred_region
            // Predicated region
            $region33: #{sphere_conv_forward.1} parent=31 // pred_check
              _
            $region34: #{sphere_conv_forward.1} parent=31 // pred_check_branch
              %190 = sbr.rel (0) target = $region36
            $region35: #{sphere_conv_forward.1} parent=31 // pred_region
              // Predicated region
              $region48: #{sphere_conv_forward.1} parent=35 // pred_check
                _
              $region49: #{sphere_conv_forward.1} parent=35 // pred_check_branch
                %231 = sbr.rel (0) target = $region51
              $region50: #{sphere_conv_forward.1} parent=35 // pred_region
                loop: start=0, step=1, limit=1
                $region52: #{sphere_conv_forward.1} parent=50 // loop_pre_header
                  _
                $region53: #{sphere_conv_forward.1} parent=50 // loop_header
                  %s233 = sphi 0, %s237
                  %p234 = scmp.ge.s32.totalorder %s233, 1
                  %s238 = sphi %s186, %s186
                  %s239 = sphi %s180, %s180
                $region54: #{sphere_conv_forward.1} parent=50 // loop_header_branch
                  %236 = sbr.rel (%p234) target = $region58
                $region55: #{sphere_conv_forward.1} parent=50 // loop_body
                  %v240 = vld [vmem:[%s238] sm:$0xff]
                  %241 = vst [vmem:[%s239] sm:$0xff] %v240
                  %v242 = vld [vmem:[%s238 + $0x10] sm:$0xff]
                  %243 = vst [vmem:[%s239 + $0x8] sm:$0xff] %v242
                  %v244 = vld [vmem:[%s238 + $0x20] sm:$0xff]
                  %245 = vst [vmem:[%s239 + $0x10] sm:$0xff] %v244
                  %v246 = vld [vmem:[%s238 + $0x30] sm:$0xff]
                  %247 = vst [vmem:[%s239 + $0x18] sm:$0xff] %v246
                  %v248 = vld [vmem:[%s238 + $0x40] sm:$0xff]
                  %249 = vst [vmem:[%s239 + $0x20] sm:$0xff] %v248
                  %v250 = vld [vmem:[%s238 + $0x50] sm:$0xff]
                  %251 = vst [vmem:[%s239 + $0x28] sm:$0xff] %v250
                  %v252 = vld [vmem:[%s238 + $0x60] sm:$0xff]
                  %253 = vst [vmem:[%s239 + $0x30] sm:$0xff] %v252
                  %v254 = vld [vmem:[%s238 + $0x70] sm:$0xff]
                  %255 = vst [vmem:[%s239 + $0x38] sm:$0xff] %v254
                  %v256 = vld [vmem:[%s238 + $0x80] sm:$0xff]
                  %257 = vst [vmem:[%s239 + $0x40] sm:$0xff] %v256
                  %v258 = vld [vmem:[%s238 + $0x90] sm:$0xff]
                  %259 = vst [vmem:[%s239 + $0x48] sm:$0xff] %v258
                  %v260 = vld [vmem:[%s238 + $0xa0] sm:$0xff]
                  %261 = vst [vmem:[%s239 + $0x50] sm:$0xff] %v260
                  %v262 = vld [vmem:[%s238 + $0xb0] sm:$0xff]
                  %263 = vst [vmem:[%s239 + $0x58] sm:$0xff] %v262
                  %v264 = vld [vmem:[%s238 + $0xc0] sm:$0xff]
                  %265 = vst [vmem:[%s239 + $0x60] sm:$0xff] %v264
                  %v266 = vld [vmem:[%s238 + $0xd0] sm:$0xff]
                  %267 = vst [vmem:[%s239 + $0x68] sm:$0xff] %v266
                $region56: #{sphere_conv_forward.1} parent=50 // loop_footer
                  %s237 = sadd.s32 1, %s233
                $region57: #{sphere_conv_forward.1} parent=50 // loop_footer_branch
                  %232 = sbr.rel target = $region53
                $region58: #{sphere_conv_forward.1} parent=50 // loop_exit
                  _
              $region51: #{sphere_conv_forward.1} parent=35 // pred_fallthru
                _
              // Predicated region
              $region59: #{sphere_conv_forward.1} parent=35 // pred_check
                _
              $region60: #{sphere_conv_forward.1} parent=35 // pred_check_branch
                %269 = sbr.rel target = $region62
              $region61: #{sphere_conv_forward.1} parent=35 // pred_region
                _
              $region62: #{sphere_conv_forward.1} parent=35 // pred_fallthru
                _
            $region36: #{sphere_conv_forward.1} parent=31 // pred_fallthru
              _
            // Predicated region
            $region37: #{sphere_conv_forward.1} parent=31 // pred_check
              _
            $region38: #{sphere_conv_forward.1} parent=31 // pred_check_branch
              %192 = sbr.rel target = $region40
            $region39: #{sphere_conv_forward.1} parent=31 // pred_region
              loop: start=0, step=1, limit=1
              $region41: #{sphere_conv_forward.1} parent=39 // loop_pre_header
                _
              $region42: #{sphere_conv_forward.1} parent=39 // loop_header
                %s195 = sphi 0, %s199
                %p196 = scmp.ge.s32.totalorder %s195, 1
                %s200 = sphi %s186, %s186
                %s201 = sphi %s180, %s180
              $region43: #{sphere_conv_forward.1} parent=39 // loop_header_branch
                %198 = sbr.rel (%p196) target = $region47
              $region44: #{sphere_conv_forward.1} parent=39 // loop_body
                %v202 = vld [vmem:[%s200] sm:$0xff]
                %203 = vst [vmem:[%s201] sm:$0xff] %v202
                %v204 = vld [vmem:[%s200 + $0x10] sm:$0xff]
                %205 = vst [vmem:[%s201 + $0x8] sm:$0xff] %v204
                %v206 = vld [vmem:[%s200 + $0x20] sm:$0xff]
                %207 = vst [vmem:[%s201 + $0x10] sm:$0xff] %v206
                %v208 = vld [vmem:[%s200 + $0x30] sm:$0xff]
                %209 = vst [vmem:[%s201 + $0x18] sm:$0xff] %v208
                %v210 = vld [vmem:[%s200 + $0x40] sm:$0xff]
                %211 = vst [vmem:[%s201 + $0x20] sm:$0xff] %v210
                %v212 = vld [vmem:[%s200 + $0x50] sm:$0xff]
                %213 = vst [vmem:[%s201 + $0x28] sm:$0xff] %v212
                %v214 = vld [vmem:[%s200 + $0x60] sm:$0xff]
                %215 = vst [vmem:[%s201 + $0x30] sm:$0xff] %v214
                %v216 = vld [vmem:[%s200 + $0x70] sm:$0xff]
                %217 = vst [vmem:[%s201 + $0x38] sm:$0xff] %v216
                %v218 = vld [vmem:[%s200 + $0x80] sm:$0xff]
                %219 = vst [vmem:[%s201 + $0x40] sm:$0xff] %v218
                %v220 = vld [vmem:[%s200 + $0x90] sm:$0xff]
                %221 = vst [vmem:[%s201 + $0x48] sm:$0xff] %v220
                %v222 = vld [vmem:[%s200 + $0xa0] sm:$0xff]
                %223 = vst [vmem:[%s201 + $0x50] sm:$0xff] %v222
                %v224 = vld [vmem:[%s200 + $0xb0] sm:$0xff]
                %225 = vst [vmem:[%s201 + $0x58] sm:$0xff] %v224
                %v226 = vld [vmem:[%s200 + $0xc0] sm:$0xff]
                %227 = vst [vmem:[%s201 + $0x60] sm:$0xff] %v226
                %v228 = vld [vmem:[%s200 + $0xd0] sm:$0xff]
                %229 = vst [vmem:[%s201 + $0x68] sm:$0xff] %v228
              $region45: #{sphere_conv_forward.1} parent=39 // loop_footer
                %s199 = sadd.s32 1, %s195
              $region46: #{sphere_conv_forward.1} parent=39 // loop_footer_branch
                %194 = sbr.rel target = $region42
              $region47: #{sphere_conv_forward.1} parent=39 // loop_exit
                _
            $region40: #{sphere_conv_forward.1} parent=31 // pred_fallthru
              _
          $region32: #{sphere_conv_forward.1} parent=27 // pred_fallthru
            _
          %270 = vnop
        $region28: #{sphere_conv_forward.1} parent=23 // pred_fallthru
          _
        // Predicated region
        $region63: #{sphere_conv_forward.1} parent=23 // pred_check
          %p271 = pneg %p73
        $region64: #{sphere_conv_forward.1} parent=23 // pred_check_branch
          %273 = sbr.rel (%p271) target = $region66
        $region65: #{sphere_conv_forward.1} parent=23 // pred_region
          %s274 = sand.u32 %s63, 1
          %s275 = sand.u32 %s63, 1
          %s276 = smul.addr %s275, 224
          %s277 = scalar_lea.vmem [#allocation3], %s276
          %s278 = smul.u32 2, %s20
          %s279 = smul.addr %s278, 8
          %s280 = scalar_lea.vmem %s1, %s279
          // Predicated region
          $region67: #{sphere_conv_forward.1} parent=65 // pred_check
            _
          $region68: #{sphere_conv_forward.1} parent=65 // pred_check_branch
            %282 = sbr.rel (0) target = $region70
          $region69: #{sphere_conv_forward.1} parent=65 // pred_region
            // Predicated region
            $region71: #{sphere_conv_forward.1} parent=69 // pred_check
              _
            $region72: #{sphere_conv_forward.1} parent=69 // pred_check_branch
              %284 = sbr.rel (0) target = $region74
            $region73: #{sphere_conv_forward.1} parent=69 // pred_region
              loop: start=0, step=1, limit=1
              $region75: #{sphere_conv_forward.1} parent=73 // loop_pre_header
                _
              $region76: #{sphere_conv_forward.1} parent=73 // loop_header
                %s286 = sphi 0, %s290
                %p287 = scmp.ge.s32.totalorder %s286, 1
                %s291 = sphi %s280, %s280
                %s292 = sphi %s277, %s277
              $region77: #{sphere_conv_forward.1} parent=73 // loop_header_branch
                %289 = sbr.rel (%p287) target = $region81
              $region78: #{sphere_conv_forward.1} parent=73 // loop_body
                %v293 = vld [vmem:[%s291] sm:$0xff]
                %294 = vst [vmem:[%s292] sm:$0xff] %v293
                %v295 = vld [vmem:[%s291 + $0x8] sm:$0xff]
                %296 = vst [vmem:[%s292 + $0x8] sm:$0xff] %v295
                %v297 = vld [vmem:[%s291 + $0x20] sm:$0xff]
                %298 = vst [vmem:[%s292 + $0x10] sm:$0xff] %v297
                %v299 = vld [vmem:[%s291 + $0x28] sm:$0xff]
                %300 = vst [vmem:[%s292 + $0x18] sm:$0xff] %v299
                %v301 = vld [vmem:[%s291 + $0x40] sm:$0xff]
                %302 = vst [vmem:[%s292 + $0x20] sm:$0xff] %v301
                %v303 = vld [vmem:[%s291 + $0x48] sm:$0xff]
                %304 = vst [vmem:[%s292 + $0x28] sm:$0xff] %v303
                %v305 = vld [vmem:[%s291 + $0x60] sm:$0xff]
                %306 = vst [vmem:[%s292 + $0x30] sm:$0xff] %v305
                %v307 = vld [vmem:[%s291 + $0x68] sm:$0xff]
                %308 = vst [vmem:[%s292 + $0x38] sm:$0xff] %v307
                %v309 = vld [vmem:[%s291 + $0x80] sm:$0xff]
                %310 = vst [vmem:[%s292 + $0x40] sm:$0xff] %v309
                %v311 = vld [vmem:[%s291 + $0x88] sm:$0xff]
                %312 = vst [vmem:[%s292 + $0x48] sm:$0xff] %v311
                %v313 = vld [vmem:[%s291 + $0xa0] sm:$0xff]
                %314 = vst [vmem:[%s292 + $0x50] sm:$0xff] %v313
                %v315 = vld [vmem:[%s291 + $0xa8] sm:$0xff]
                %316 = vst [vmem:[%s292 + $0x58] sm:$0xff] %v315
                %v317 = vld [vmem:[%s291 + $0xc0] sm:$0xff]
                %318 = vst [vmem:[%s292 + $0x60] sm:$0xff] %v317
                %v319 = vld [vmem:[%s291 + $0xc8] sm:$0xff]
                %320 = vst [vmem:[%s292 + $0x68] sm:$0xff] %v319
                %v321 = vld [vmem:[%s291 + $0xe0] sm:$0xff]
                %322 = vst [vmem:[%s292 + $0x70] sm:$0xff] %v321
                %v323 = vld [vmem:[%s291 + $0xe8] sm:$0xff]
                %324 = vst [vmem:[%s292 + $0x78] sm:$0xff] %v323
                %v325 = vld [vmem:[%s291 + $0x100] sm:$0xff]
                %326 = vst [vmem:[%s292 + $0x80] sm:$0xff] %v325
                %v327 = vld [vmem:[%s291 + $0x108] sm:$0xff]
                %328 = vst [vmem:[%s292 + $0x88] sm:$0xff] %v327
                %v329 = vld [vmem:[%s291 + $0x120] sm:$0xff]
                %330 = vst [vmem:[%s292 + $0x90] sm:$0xff] %v329
                %v331 = vld [vmem:[%s291 + $0x128] sm:$0xff]
                %332 = vst [vmem:[%s292 + $0x98] sm:$0xff] %v331
                %v333 = vld [vmem:[%s291 + $0x140] sm:$0xff]
                %334 = vst [vmem:[%s292 + $0xa0] sm:$0xff] %v333
                %v335 = vld [vmem:[%s291 + $0x148] sm:$0xff]
                %336 = vst [vmem:[%s292 + $0xa8] sm:$0xff] %v335
                %v337 = vld [vmem:[%s291 + $0x160] sm:$0xff]
                %338 = vst [vmem:[%s292 + $0xb0] sm:$0xff] %v337
                %v339 = vld [vmem:[%s291 + $0x168] sm:$0xff]
                %340 = vst [vmem:[%s292 + $0xb8] sm:$0xff] %v339
                %v341 = vld [vmem:[%s291 + $0x180] sm:$0xff]
                %342 = vst [vmem:[%s292 + $0xc0] sm:$0xff] %v341
                %v343 = vld [vmem:[%s291 + $0x188] sm:$0xff]
                %344 = vst [vmem:[%s292 + $0xc8] sm:$0xff] %v343
                %v345 = vld [vmem:[%s291 + $0x1a0] sm:$0xff]
                %346 = vst [vmem:[%s292 + $0xd0] sm:$0xff] %v345
                %v347 = vld [vmem:[%s291 + $0x1a8] sm:$0xff]
                %348 = vst [vmem:[%s292 + $0xd8] sm:$0xff] %v347
              $region79: #{sphere_conv_forward.1} parent=73 // loop_footer
                %s290 = sadd.s32 1, %s286
              $region80: #{sphere_conv_forward.1} parent=73 // loop_footer_branch
                %285 = sbr.rel target = $region76
              $region81: #{sphere_conv_forward.1} parent=73 // loop_exit
                _
            $region74: #{sphere_conv_forward.1} parent=69 // pred_fallthru
              _
            // Predicated region
            $region82: #{sphere_conv_forward.1} parent=69 // pred_check
              _
            $region83: #{sphere_conv_forward.1} parent=69 // pred_check_branch
              %350 = sbr.rel target = $region85
            $region84: #{sphere_conv_forward.1} parent=69 // pred_region
              _
            $region85: #{sphere_conv_forward.1} parent=69 // pred_fallthru
              _
          $region70: #{sphere_conv_forward.1} parent=65 // pred_fallthru
            _
          %351 = vnop
        $region66: #{sphere_conv_forward.1} parent=23 // pred_fallthru
          _
      $region24: #{sphere_conv_forward.1} parent=5 // pred_fallthru
        _
      %p352 = scmp.le.s32.totalorder 1, %s13
      %p353 = scmp.lt.s32.totalorder %s13, 5
      %p354 = pnand %p352, %p353
      %p355 = pneg %p354
      // Predicated region
      $region86: #{sphere_conv_forward.1} parent=5 // pred_check
        _
      $region87: #{sphere_conv_forward.1} parent=5 // pred_check_branch
        %357 = sbr.rel (%p354) target = $region89
      $region88: #{sphere_conv_forward.1} parent=5 // pred_region
        %s358 = ssub.s32 %s13, 1
        %s359 = sand.u32 %s40, 1
        %s360 = sand.u32 %s40, 1
        %s361 = smul.addr %s360, 112
        %s362 = scalar_lea.vmem [#allocation2], %s361
        // Predicated region
        $region90: #{sphere_conv_forward.1} parent=88 // pred_check
          %p363 = pneg %p53
        $region91: #{sphere_conv_forward.1} parent=88 // pred_check_branch
          %365 = sbr.rel (%p363) target = $region93
        $region92: #{sphere_conv_forward.1} parent=88 // pred_region
          _
        $region93: #{sphere_conv_forward.1} parent=88 // pred_fallthru
          _
        %s366 = sand.u32 %s66, 1
        %s367 = sand.u32 %s66, 1
        %s368 = smul.addr %s367, 224
        %s369 = scalar_lea.vmem [#allocation3], %s368
        // Predicated region
        $region94: #{sphere_conv_forward.1} parent=88 // pred_check
          %p370 = pneg %p79
        $region95: #{sphere_conv_forward.1} parent=88 // pred_check_branch
          %372 = sbr.rel (%p370) target = $region97
        $region96: #{sphere_conv_forward.1} parent=88 // pred_region
          _
        $region97: #{sphere_conv_forward.1} parent=88 // pred_fallthru
          _
        %s373 = sand.u32 %s40, 1
        %s374 = sand.u32 %s40, 1
        %s375 = smul.addr %s374, 112
        %s376 = scalar_lea.vmem [#allocation2], %s375
        %p377 = pneg %p53
        %p378 = pneg %p50
        %s379 = sand.u32 %s66, 1
        %s380 = sand.u32 %s66, 1
        %s381 = smul.addr %s380, 224
        %s382 = scalar_lea.vmem [#allocation3], %s381
        %p383 = pneg %p79
        %p384 = pneg %p76
        %p385 = pneg %p100
        %p386 = pneg %p97
        %p387 = pneg %p121
        %p388 = pneg %p118
        %p389 = pneg %p149
        %p390 = pneg %p146
        %s391 = sand.u32 %s136, 1
        %s392 = scalar_lea.sflag [#allocation5], %s391
        %s393 = sand.u32 %s136, 1
        %s394 = smul.addr %s393, 32
        %s395 = scalar_lea.vmem [#allocation4], %s394
        %s396 = smul.u32 2, %s23
        %s397 = smul.u32 2, %s22
        %s398 = smul.u32 2, %s22
        %s399 = smul.u32 2, %s23
        %s400 = smul.u32 2, %s22
        %v401 = vld [vmem:[%s3] sm:$0xff]
        %v402 = vld [vmem:[%s362] sm:$0xff]
        %v403 = vld [vmem:[%s369] sm:$0xff]
        %v404 = vld [vmem:[%s369 + $0x8] sm:$0xff]
        %v405 = vld [vmem:[%s369 + $0x10] sm:$0x1]
        %v406 = vld [vmem:[%s369 + $0x18] sm:$0x1]
        %v409 = vunpack.c.l.s4 1966171168
        %v410 = vunpack.c.0.s8 %v409
        %v411 = vlaneseq
        %v412 = vshrl.u32 %v411, 7
        %v413 = vsub.s32 %v410, %v412
        %v414 = vrot.slane %v402, %v413
        %v415 = vcombine.high %v414, %v414
        %v417 = vunpack.c.l.s4 1966171168
        %v418 = vunpack.c.0.s8 %v417
        %v419 = vlaneseq
        %v420 = vshrl.u32 %v419, 7
        %v421 = vsub.s32 %v418, %v420
        %v422 = vrot.slane %v414, %v421
        %v424 = vunpack.c.l.s4 1966171168
        %v425 = vunpack.c.0.s8 %v424
        %v426 = vlaneseq
        %v427 = vshrl.u32 %v426, 7
        %v428 = vsub.s32 %v425, %v427
        %v429 = vrot.slane %v415, %v428
        %v430 = vcombine.high %v422, %v422
        %v431 = vcombine.high %v429, %v429
        %v432 = vlaneseq
        %v433 = vshrl.u32 %v432, 7
        %v434 = vsub.s32 0, %v433
        %v435 = vrot.slane %v422, %v434
        %v436 = vlaneseq
        %v437 = vshrl.u32 %v436, 7
        %v438 = vsub.s32 1, %v437
        %v439 = vrot.slane %v422, %v438
        %v440 = vlaneseq
        %v441 = vshrl.u32 %v440, 7
        %v442 = vsub.s32 0, %v441
        %v443 = vrot.slane %v429, %v442
        %v444 = vlaneseq
        %v445 = vshrl.u32 %v444, 7
        %v446 = vsub.s32 1, %v445
        %v447 = vrot.slane %v429, %v446
        %v448 = vlaneseq
        %v449 = vshrl.u32 %v448, 7
        %v450 = vsub.s32 0, %v449
        %v451 = vrot.slane %v430, %v450
        %v452 = vlaneseq
        %v453 = vshrl.u32 %v452, 7
        %v454 = vsub.s32 1, %v453
        %v455 = vrot.slane %v430, %v454
        %v456 = vlaneseq
        %v457 = vshrl.u32 %v456, 7
        %v458 = vsub.s32 0, %v457
        %v459 = vrot.slane %v431, %v458
        %v460 = vlaneseq
        %v461 = vshrl.u32 %v460, 7
        %v462 = vsub.s32 1, %v461
        %v463 = vrot.slane %v431, %v462
        %v472 = vmul.f32 %v435, %v403
        %v473 = vmul.f32 %v439, %v404
        %v474 = vmul.f32 %v435, %v405
        %v475 = vmul.f32 %v439, %v406
        %v476 = vmul.f32 %v443, %v403
        %v477 = vmul.f32 %v447, %v404
        %v478 = vmul.f32 %v443, %v405
        %v479 = vmul.f32 %v447, %v406
        %v480 = vmul.f32 %v451, %v403
        %v481 = vmul.f32 %v455, %v404
        %v482 = vmul.f32 %v451, %v405
        %v483 = vmul.f32 %v455, %v406
        %v484 = vmul.f32 %v459, %v403
        %v485 = vmul.f32 %v463, %v404
        %v486 = vmul.f32 %v459, %v405
        %v487 = vmul.f32 %v463, %v406
        %s488 = scalar_lea.vmem %s362, 8 [#allocation2]
        %v489 = vld [vmem:[%s488] sm:$0xff]
        %s490 = scalar_lea.vmem %s369, 32 [#allocation3]
        %v491 = vld [vmem:[%s490] sm:$0xff]
        %v492 = vld [vmem:[%s490 + $0x8] sm:$0xff]
        %v493 = vld [vmem:[%s490 + $0x10] sm:$0x1]
        %v494 = vld [vmem:[%s490 + $0x18] sm:$0x1]
        %v497 = vunpack.c.l.s4 1966171168
        %v498 = vunpack.c.0.s8 %v497
        %v499 = vlaneseq
        %v500 = vshrl.u32 %v499, 7
        %v501 = vsub.s32 %v498, %v500
        %v502 = vrot.slane %v489, %v501
        %v503 = vcombine.high %v502, %v502
        %v505 = vunpack.c.l.s4 1966171168
        %v506 = vunpack.c.0.s8 %v505
        %v507 = vlaneseq
        %v508 = vshrl.u32 %v507, 7
        %v509 = vsub.s32 %v506, %v508
        %v510 = vrot.slane %v502, %v509
        %v512 = vunpack.c.l.s4 1966171168
        %v513 = vunpack.c.0.s8 %v512
        %v514 = vlaneseq
        %v515 = vshrl.u32 %v514, 7
        %v516 = vsub.s32 %v513, %v515
        %v517 = vrot.slane %v503, %v516
        %v518 = vcombine.high %v510, %v510
        %v519 = vcombine.high %v517, %v517
        %v520 = vlaneseq
        %v521 = vshrl.u32 %v520, 7
        %v522 = vsub.s32 0, %v521
        %v523 = vrot.slane %v510, %v522
        %v524 = vlaneseq
        %v525 = vshrl.u32 %v524, 7
        %v526 = vsub.s32 1, %v525
        %v527 = vrot.slane %v510, %v526
        %v528 = vlaneseq
        %v529 = vshrl.u32 %v528, 7
        %v530 = vsub.s32 0, %v529
        %v531 = vrot.slane %v517, %v530
        %v532 = vlaneseq
        %v533 = vshrl.u32 %v532, 7
        %v534 = vsub.s32 1, %v533
        %v535 = vrot.slane %v517, %v534
        %v536 = vlaneseq
        %v537 = vshrl.u32 %v536, 7
        %v538 = vsub.s32 0, %v537
        %v539 = vrot.slane %v518, %v538
        %v540 = vlaneseq
        %v541 = vshrl.u32 %v540, 7
        %v542 = vsub.s32 1, %v541
        %v543 = vrot.slane %v518, %v542
        %v544 = vlaneseq
        %v545 = vshrl.u32 %v544, 7
        %v546 = vsub.s32 0, %v545
        %v547 = vrot.slane %v519, %v546
        %v548 = vlaneseq
        %v549 = vshrl.u32 %v548, 7
        %v550 = vsub.s32 1, %v549
        %v551 = vrot.slane %v519, %v550
        %v560 = vmul.f32 %v523, %v491
        %v561 = vmul.f32 %v527, %v492
        %v562 = vmul.f32 %v523, %v493
        %v563 = vmul.f32 %v527, %v494
        %v564 = vmul.f32 %v531, %v491
        %v565 = vmul.f32 %v535, %v492
        %v566 = vmul.f32 %v531, %v493
        %v567 = vmul.f32 %v535, %v494
        %v568 = vmul.f32 %v539, %v491
        %v569 = vmul.f32 %v543, %v492
        %v570 = vmul.f32 %v539, %v493
        %v571 = vmul.f32 %v543, %v494
        %v572 = vmul.f32 %v547, %v491
        %v573 = vmul.f32 %v551, %v492
        %v574 = vmul.f32 %v547, %v493
        %v575 = vmul.f32 %v551, %v494
        %v576 = vadd.f32 %v472, %v560
        %v577 = vadd.f32 %v473, %v561
        %v578 = vadd.f32 %v474, %v562
        %v579 = vadd.f32 %v475, %v563
        %v580 = vadd.f32 %v476, %v564
        %v581 = vadd.f32 %v477, %v565
        %v582 = vadd.f32 %v478, %v566
        %v583 = vadd.f32 %v479, %v567
        %v584 = vadd.f32 %v480, %v568
        %v585 = vadd.f32 %v481, %v569
        %v586 = vadd.f32 %v482, %v570
        %v587 = vadd.f32 %v483, %v571
        %v588 = vadd.f32 %v484, %v572
        %v589 = vadd.f32 %v485, %v573
        %v590 = vadd.f32 %v486, %v574
        %v591 = vadd.f32 %v487, %v575
        %s592 = scalar_lea.vmem %s362, 16 [#allocation2]
        %v593 = vld [vmem:[%s592] sm:$0xff]
        %s594 = scalar_lea.vmem %s369, 64 [#allocation3]
        %v595 = vld [vmem:[%s594] sm:$0xff]
        %v596 = vld [vmem:[%s594 + $0x8] sm:$0xff]
        %v597 = vld [vmem:[%s594 + $0x10] sm:$0x1]
        %v598 = vld [vmem:[%s594 + $0x18] sm:$0x1]
        %v601 = vunpack.c.l.s4 1966171168
        %v602 = vunpack.c.0.s8 %v601
        %v603 = vlaneseq
        %v604 = vshrl.u32 %v603, 7
        %v605 = vsub.s32 %v602, %v604
        %v606 = vrot.slane %v593, %v605
        %v607 = vcombine.high %v606, %v606
        %v609 = vunpack.c.l.s4 1966171168
        %v610 = vunpack.c.0.s8 %v609
        %v611 = vlaneseq
        %v612 = vshrl.u32 %v611, 7
        %v613 = vsub.s32 %v610, %v612
        %v614 = vrot.slane %v606, %v613
        %v616 = vunpack.c.l.s4 1966171168
        %v617 = vunpack.c.0.s8 %v616
        %v618 = vlaneseq
        %v619 = vshrl.u32 %v618, 7
        %v620 = vsub.s32 %v617, %v619
        %v621 = vrot.slane %v607, %v620
        %v622 = vcombine.high %v614, %v614
        %v623 = vcombine.high %v621, %v621
        %v624 = vlaneseq
        %v625 = vshrl.u32 %v624, 7
        %v626 = vsub.s32 0, %v625
        %v627 = vrot.slane %v614, %v626
        %v628 = vlaneseq
        %v629 = vshrl.u32 %v628, 7
        %v630 = vsub.s32 1, %v629
        %v631 = vrot.slane %v614, %v630
        %v632 = vlaneseq
        %v633 = vshrl.u32 %v632, 7
        %v634 = vsub.s32 0, %v633
        %v635 = vrot.slane %v621, %v634
        %v636 = vlaneseq
        %v637 = vshrl.u32 %v636, 7
        %v638 = vsub.s32 1, %v637
        %v639 = vrot.slane %v621, %v638
        %v640 = vlaneseq
        %v641 = vshrl.u32 %v640, 7
        %v642 = vsub.s32 0, %v641
        %v643 = vrot.slane %v622, %v642
        %v644 = vlaneseq
        %v645 = vshrl.u32 %v644, 7
        %v646 = vsub.s32 1, %v645
        %v647 = vrot.slane %v622, %v646
        %v648 = vlaneseq
        %v649 = vshrl.u32 %v648, 7
        %v650 = vsub.s32 0, %v649
        %v651 = vrot.slane %v623, %v650
        %v652 = vlaneseq
        %v653 = vshrl.u32 %v652, 7
        %v654 = vsub.s32 1, %v653
        %v655 = vrot.slane %v623, %v654
        %v664 = vmul.f32 %v627, %v595
        %v665 = vmul.f32 %v631, %v596
        %v666 = vmul.f32 %v627, %v597
        %v667 = vmul.f32 %v631, %v598
        %v668 = vmul.f32 %v635, %v595
        %v669 = vmul.f32 %v639, %v596
        %v670 = vmul.f32 %v635, %v597
        %v671 = vmul.f32 %v639, %v598
        %v672 = vmul.f32 %v643, %v595
        %v673 = vmul.f32 %v647, %v596
        %v674 = vmul.f32 %v643, %v597
        %v675 = vmul.f32 %v647, %v598
        %v676 = vmul.f32 %v651, %v595
        %v677 = vmul.f32 %v655, %v596
        %v678 = vmul.f32 %v651, %v597
        %v679 = vmul.f32 %v655, %v598
        %v680 = vadd.f32 %v576, %v664
        %v681 = vadd.f32 %v577, %v665
        %v682 = vadd.f32 %v578, %v666
        %v683 = vadd.f32 %v579, %v667
        %v684 = vadd.f32 %v580, %v668
        %v685 = vadd.f32 %v581, %v669
        %v686 = vadd.f32 %v582, %v670
        %v687 = vadd.f32 %v583, %v671
        %v688 = vadd.f32 %v584, %v672
        %v689 = vadd.f32 %v585, %v673
        %v690 = vadd.f32 %v586, %v674
        %v691 = vadd.f32 %v587, %v675
        %v692 = vadd.f32 %v588, %v676
        %v693 = vadd.f32 %v589, %v677
        %v694 = vadd.f32 %v590, %v678
        %v695 = vadd.f32 %v591, %v679
        %s696 = scalar_lea.vmem %s362, 24 [#allocation2]
        %v697 = vld [vmem:[%s696] sm:$0xff]
        %s698 = scalar_lea.vmem %s369, 96 [#allocation3]
        %v699 = vld [vmem:[%s698] sm:$0xff]
        %v700 = vld [vmem:[%s698 + $0x8] sm:$0xff]
        %v701 = vld [vmem:[%s698 + $0x10] sm:$0x1]
        %v702 = vld [vmem:[%s698 + $0x18] sm:$0x1]
        %v705 = vunpack.c.l.s4 1966171168
        %v706 = vunpack.c.0.s8 %v705
        %v707 = vlaneseq
        %v708 = vshrl.u32 %v707, 7
        %v709 = vsub.s32 %v706, %v708
        %v710 = vrot.slane %v697, %v709
        %v711 = vcombine.high %v710, %v710
        %v713 = vunpack.c.l.s4 1966171168
        %v714 = vunpack.c.0.s8 %v713
        %v715 = vlaneseq
        %v716 = vshrl.u32 %v715, 7
        %v717 = vsub.s32 %v714, %v716
        %v718 = vrot.slane %v710, %v717
        %v720 = vunpack.c.l.s4 1966171168
        %v721 = vunpack.c.0.s8 %v720
        %v722 = vlaneseq
        %v723 = vshrl.u32 %v722, 7
        %v724 = vsub.s32 %v721, %v723
        %v725 = vrot.slane %v711, %v724
        %v726 = vcombine.high %v718, %v718
        %v727 = vcombine.high %v725, %v725
        %v728 = vlaneseq
        %v729 = vshrl.u32 %v728, 7
        %v730 = vsub.s32 0, %v729
        %v731 = vrot.slane %v718, %v730
        %v732 = vlaneseq
        %v733 = vshrl.u32 %v732, 7
        %v734 = vsub.s32 1, %v733
        %v735 = vrot.slane %v718, %v734
        %v736 = vlaneseq
        %v737 = vshrl.u32 %v736, 7
        %v738 = vsub.s32 0, %v737
        %v739 = vrot.slane %v725, %v738
        %v740 = vlaneseq
        %v741 = vshrl.u32 %v740, 7
        %v742 = vsub.s32 1, %v741
        %v743 = vrot.slane %v725, %v742
        %v744 = vlaneseq
        %v745 = vshrl.u32 %v744, 7
        %v746 = vsub.s32 0, %v745
        %v747 = vrot.slane %v726, %v746
        %v748 = vlaneseq
        %v749 = vshrl.u32 %v748, 7
        %v750 = vsub.s32 1, %v749
        %v751 = vrot.slane %v726, %v750
        %v752 = vlaneseq
        %v753 = vshrl.u32 %v752, 7
        %v754 = vsub.s32 0, %v753
        %v755 = vrot.slane %v727, %v754
        %v756 = vlaneseq
        %v757 = vshrl.u32 %v756, 7
        %v758 = vsub.s32 1, %v757
        %v759 = vrot.slane %v727, %v758
        %v768 = vmul.f32 %v731, %v699
        %v769 = vmul.f32 %v735, %v700
        %v770 = vmul.f32 %v731, %v701
        %v771 = vmul.f32 %v735, %v702
        %v772 = vmul.f32 %v739, %v699
        %v773 = vmul.f32 %v743, %v700
        %v774 = vmul.f32 %v739, %v701
        %v775 = vmul.f32 %v743, %v702
        %v776 = vmul.f32 %v747, %v699
        %v777 = vmul.f32 %v751, %v700
        %v778 = vmul.f32 %v747, %v701
        %v779 = vmul.f32 %v751, %v702
        %v780 = vmul.f32 %v755, %v699
        %v781 = vmul.f32 %v759, %v700
        %v782 = vmul.f32 %v755, %v701
        %v783 = vmul.f32 %v759, %v702
        %v784 = vadd.f32 %v680, %v768
        %v785 = vadd.f32 %v681, %v769
        %v786 = vadd.f32 %v682, %v770
        %v787 = vadd.f32 %v683, %v771
        %v788 = vadd.f32 %v684, %v772
        %v789 = vadd.f32 %v685, %v773
        %v790 = vadd.f32 %v686, %v774
        %v791 = vadd.f32 %v687, %v775
        %v792 = vadd.f32 %v688, %v776
        %v793 = vadd.f32 %v689, %v777
        %v794 = vadd.f32 %v690, %v778
        %v795 = vadd.f32 %v691, %v779
        %v796 = vadd.f32 %v692, %v780
        %v797 = vadd.f32 %v693, %v781
        %v798 = vadd.f32 %v694, %v782
        %v799 = vadd.f32 %v695, %v783
        %s800 = scalar_lea.vmem %s362, 32 [#allocation2]
        %v801 = vld [vmem:[%s800] sm:$0xff]
        %s802 = scalar_lea.vmem %s369, 128 [#allocation3]
        %v803 = vld [vmem:[%s802] sm:$0xff]
        %v804 = vld [vmem:[%s802 + $0x8] sm:$0xff]
        %v805 = vld [vmem:[%s802 + $0x10] sm:$0x1]
        %v806 = vld [vmem:[%s802 + $0x18] sm:$0x1]
        %v809 = vunpack.c.l.s4 1966171168
        %v810 = vunpack.c.0.s8 %v809
        %v811 = vlaneseq
        %v812 = vshrl.u32 %v811, 7
        %v813 = vsub.s32 %v810, %v812
        %v814 = vrot.slane %v801, %v813
        %v815 = vcombine.high %v814, %v814
        %v817 = vunpack.c.l.s4 1966171168
        %v818 = vunpack.c.0.s8 %v817
        %v819 = vlaneseq
        %v820 = vshrl.u32 %v819, 7
        %v821 = vsub.s32 %v818, %v820
        %v822 = vrot.slane %v814, %v821
        %v824 = vunpack.c.l.s4 1966171168
        %v825 = vunpack.c.0.s8 %v824
        %v826 = vlaneseq
        %v827 = vshrl.u32 %v826, 7
        %v828 = vsub.s32 %v825, %v827
        %v829 = vrot.slane %v815, %v828
        %v830 = vcombine.high %v822, %v822
        %v831 = vcombine.high %v829, %v829
        %v832 = vlaneseq
        %v833 = vshrl.u32 %v832, 7
        %v834 = vsub.s32 0, %v833
        %v835 = vrot.slane %v822, %v834
        %v836 = vlaneseq
        %v837 = vshrl.u32 %v836, 7
        %v838 = vsub.s32 1, %v837
        %v839 = vrot.slane %v822, %v838
        %v840 = vlaneseq
        %v841 = vshrl.u32 %v840, 7
        %v842 = vsub.s32 0, %v841
        %v843 = vrot.slane %v829, %v842
        %v844 = vlaneseq
        %v845 = vshrl.u32 %v844, 7
        %v846 = vsub.s32 1, %v845
        %v847 = vrot.slane %v829, %v846
        %v848 = vlaneseq
        %v849 = vshrl.u32 %v848, 7
        %v850 = vsub.s32 0, %v849
        %v851 = vrot.slane %v830, %v850
        %v852 = vlaneseq
        %v853 = vshrl.u32 %v852, 7
        %v854 = vsub.s32 1, %v853
        %v855 = vrot.slane %v830, %v854
        %v856 = vlaneseq
        %v857 = vshrl.u32 %v856, 7
        %v858 = vsub.s32 0, %v857
        %v859 = vrot.slane %v831, %v858
        %v860 = vlaneseq
        %v861 = vshrl.u32 %v860, 7
        %v862 = vsub.s32 1, %v861
        %v863 = vrot.slane %v831, %v862
        %v872 = vmul.f32 %v835, %v803
        %v873 = vmul.f32 %v839, %v804
        %v874 = vmul.f32 %v835, %v805
        %v875 = vmul.f32 %v839, %v806
        %v876 = vmul.f32 %v843, %v803
        %v877 = vmul.f32 %v847, %v804
        %v878 = vmul.f32 %v843, %v805
        %v879 = vmul.f32 %v847, %v806
        %v880 = vmul.f32 %v851, %v803
        %v881 = vmul.f32 %v855, %v804
        %v882 = vmul.f32 %v851, %v805
        %v883 = vmul.f32 %v855, %v806
        %v884 = vmul.f32 %v859, %v803
        %v885 = vmul.f32 %v863, %v804
        %v886 = vmul.f32 %v859, %v805
        %v887 = vmul.f32 %v863, %v806
        %v888 = vadd.f32 %v784, %v872
        %v889 = vadd.f32 %v785, %v873
        %v890 = vadd.f32 %v786, %v874
        %v891 = vadd.f32 %v787, %v875
        %v892 = vadd.f32 %v788, %v876
        %v893 = vadd.f32 %v789, %v877
        %v894 = vadd.f32 %v790, %v878
        %v895 = vadd.f32 %v791, %v879
        %v896 = vadd.f32 %v792, %v880
        %v897 = vadd.f32 %v793, %v881
        %v898 = vadd.f32 %v794, %v882
        %v899 = vadd.f32 %v795, %v883
        %v900 = vadd.f32 %v796, %v884
        %v901 = vadd.f32 %v797, %v885
        %v902 = vadd.f32 %v798, %v886
        %v903 = vadd.f32 %v799, %v887
        %s904 = scalar_lea.vmem %s362, 40 [#allocation2]
        %v905 = vld [vmem:[%s904] sm:$0xff]
        %s906 = scalar_lea.vmem %s369, 160 [#allocation3]
        %v907 = vld [vmem:[%s906] sm:$0xff]
        %v908 = vld [vmem:[%s906 + $0x8] sm:$0xff]
        %v909 = vld [vmem:[%s906 + $0x10] sm:$0x1]
        %v910 = vld [vmem:[%s906 + $0x18] sm:$0x1]
        %v913 = vunpack.c.l.s4 1966171168
        %v914 = vunpack.c.0.s8 %v913
        %v915 = vlaneseq
        %v916 = vshrl.u32 %v915, 7
        %v917 = vsub.s32 %v914, %v916
        %v918 = vrot.slane %v905, %v917
        %v919 = vcombine.high %v918, %v918
        %v921 = vunpack.c.l.s4 1966171168
        %v922 = vunpack.c.0.s8 %v921
        %v923 = vlaneseq
        %v924 = vshrl.u32 %v923, 7
        %v925 = vsub.s32 %v922, %v924
        %v926 = vrot.slane %v918, %v925
        %v928 = vunpack.c.l.s4 1966171168
        %v929 = vunpack.c.0.s8 %v928
        %v930 = vlaneseq
        %v931 = vshrl.u32 %v930, 7
        %v932 = vsub.s32 %v929, %v931
        %v933 = vrot.slane %v919, %v932
        %v934 = vcombine.high %v926, %v926
        %v935 = vcombine.high %v933, %v933
        %v936 = vlaneseq
        %v937 = vshrl.u32 %v936, 7
        %v938 = vsub.s32 0, %v937
        %v939 = vrot.slane %v926, %v938
        %v940 = vlaneseq
        %v941 = vshrl.u32 %v940, 7
        %v942 = vsub.s32 1, %v941
        %v943 = vrot.slane %v926, %v942
        %v944 = vlaneseq
        %v945 = vshrl.u32 %v944, 7
        %v946 = vsub.s32 0, %v945
        %v947 = vrot.slane %v933, %v946
        %v948 = vlaneseq
        %v949 = vshrl.u32 %v948, 7
        %v950 = vsub.s32 1, %v949
        %v951 = vrot.slane %v933, %v950
        %v952 = vlaneseq
        %v953 = vshrl.u32 %v952, 7
        %v954 = vsub.s32 0, %v953
        %v955 = vrot.slane %v934, %v954
        %v956 = vlaneseq
        %v957 = vshrl.u32 %v956, 7
        %v958 = vsub.s32 1, %v957
        %v959 = vrot.slane %v934, %v958
        %v960 = vlaneseq
        %v961 = vshrl.u32 %v960, 7
        %v962 = vsub.s32 0, %v961
        %v963 = vrot.slane %v935, %v962
        %v964 = vlaneseq
        %v965 = vshrl.u32 %v964, 7
        %v966 = vsub.s32 1, %v965
        %v967 = vrot.slane %v935, %v966
        %v976 = vmul.f32 %v939, %v907
        %v977 = vmul.f32 %v943, %v908
        %v978 = vmul.f32 %v939, %v909
        %v979 = vmul.f32 %v943, %v910
        %v980 = vmul.f32 %v947, %v907
        %v981 = vmul.f32 %v951, %v908
        %v982 = vmul.f32 %v947, %v909
        %v983 = vmul.f32 %v951, %v910
        %v984 = vmul.f32 %v955, %v907
        %v985 = vmul.f32 %v959, %v908
        %v986 = vmul.f32 %v955, %v909
        %v987 = vmul.f32 %v959, %v910
        %v988 = vmul.f32 %v963, %v907
        %v989 = vmul.f32 %v967, %v908
        %v990 = vmul.f32 %v963, %v909
        %v991 = vmul.f32 %v967, %v910
        %v992 = vadd.f32 %v888, %v976
        %v993 = vadd.f32 %v889, %v977
        %v994 = vadd.f32 %v890, %v978
        %v995 = vadd.f32 %v891, %v979
        %v996 = vadd.f32 %v892, %v980
        %v997 = vadd.f32 %v893, %v981
        %v998 = vadd.f32 %v894, %v982
        %v999 = vadd.f32 %v895, %v983
        %v1000 = vadd.f32 %v896, %v984
        %v1001 = vadd.f32 %v897, %v985
        %v1002 = vadd.f32 %v898, %v986
        %v1003 = vadd.f32 %v899, %v987
        %v1004 = vadd.f32 %v900, %v988
        %v1005 = vadd.f32 %v901, %v989
        %v1006 = vadd.f32 %v902, %v990
        %v1007 = vadd.f32 %v903, %v991
        %s1008 = scalar_lea.vmem %s362, 48 [#allocation2]
        %v1009 = vld [vmem:[%s1008] sm:$0xff]
        %s1010 = scalar_lea.vmem %s369, 192 [#allocation3]
        %v1011 = vld [vmem:[%s1010] sm:$0xff]
        %v1012 = vld [vmem:[%s1010 + $0x8] sm:$0xff]
        %v1013 = vld [vmem:[%s1010 + $0x10] sm:$0x1]
        %v1014 = vld [vmem:[%s1010 + $0x18] sm:$0x1]
        %v1017 = vunpack.c.l.s4 1966171168
        %v1018 = vunpack.c.0.s8 %v1017
        %v1019 = vlaneseq
        %v1020 = vshrl.u32 %v1019, 7
        %v1021 = vsub.s32 %v1018, %v1020
        %v1022 = vrot.slane %v1009, %v1021
        %v1023 = vcombine.high %v1022, %v1022
        %v1025 = vunpack.c.l.s4 1966171168
        %v1026 = vunpack.c.0.s8 %v1025
        %v1027 = vlaneseq
        %v1028 = vshrl.u32 %v1027, 7
        %v1029 = vsub.s32 %v1026, %v1028
        %v1030 = vrot.slane %v1022, %v1029
        %v1032 = vunpack.c.l.s4 1966171168
        %v1033 = vunpack.c.0.s8 %v1032
        %v1034 = vlaneseq
        %v1035 = vshrl.u32 %v1034, 7
        %v1036 = vsub.s32 %v1033, %v1035
        %v1037 = vrot.slane %v1023, %v1036
        %v1038 = vcombine.high %v1030, %v1030
        %v1039 = vcombine.high %v1037, %v1037
        %v1040 = vlaneseq
        %v1041 = vshrl.u32 %v1040, 7
        %v1042 = vsub.s32 0, %v1041
        %v1043 = vrot.slane %v1030, %v1042
        %v1044 = vlaneseq
        %v1045 = vshrl.u32 %v1044, 7
        %v1046 = vsub.s32 1, %v1045
        %v1047 = vrot.slane %v1030, %v1046
        %v1048 = vlaneseq
        %v1049 = vshrl.u32 %v1048, 7
        %v1050 = vsub.s32 0, %v1049
        %v1051 = vrot.slane %v1037, %v1050
        %v1052 = vlaneseq
        %v1053 = vshrl.u32 %v1052, 7
        %v1054 = vsub.s32 1, %v1053
        %v1055 = vrot.slane %v1037, %v1054
        %v1056 = vlaneseq
        %v1057 = vshrl.u32 %v1056, 7
        %v1058 = vsub.s32 0, %v1057
        %v1059 = vrot.slane %v1038, %v1058
        %v1060 = vlaneseq
        %v1061 = vshrl.u32 %v1060, 7
        %v1062 = vsub.s32 1, %v1061
        %v1063 = vrot.slane %v1038, %v1062
        %v1064 = vlaneseq
        %v1065 = vshrl.u32 %v1064, 7
        %v1066 = vsub.s32 0, %v1065
        %v1067 = vrot.slane %v1039, %v1066
        %v1068 = vlaneseq
        %v1069 = vshrl.u32 %v1068, 7
        %v1070 = vsub.s32 1, %v1069
        %v1071 = vrot.slane %v1039, %v1070
        %v1080 = vmul.f32 %v1043, %v1011
        %v1081 = vmul.f32 %v1047, %v1012
        %v1082 = vmul.f32 %v1043, %v1013
        %v1083 = vmul.f32 %v1047, %v1014
        %v1084 = vmul.f32 %v1051, %v1011
        %v1085 = vmul.f32 %v1055, %v1012
        %v1086 = vmul.f32 %v1051, %v1013
        %v1087 = vmul.f32 %v1055, %v1014
        %v1088 = vmul.f32 %v1059, %v1011
        %v1089 = vmul.f32 %v1063, %v1012
        %v1090 = vmul.f32 %v1059, %v1013
        %v1091 = vmul.f32 %v1063, %v1014
        %v1092 = vmul.f32 %v1067, %v1011
        %v1093 = vmul.f32 %v1071, %v1012
        %v1094 = vmul.f32 %v1067, %v1013
        %v1095 = vmul.f32 %v1071, %v1014
        %v1096 = vadd.f32 %v992, %v1080
        %v1097 = vadd.f32 %v993, %v1081
        %v1098 = vadd.f32 %v994, %v1082
        %v1099 = vadd.f32 %v995, %v1083
        %v1100 = vadd.f32 %v996, %v1084
        %v1101 = vadd.f32 %v997, %v1085
        %v1102 = vadd.f32 %v998, %v1086
        %v1103 = vadd.f32 %v999, %v1087
        %v1104 = vadd.f32 %v1000, %v1088
        %v1105 = vadd.f32 %v1001, %v1089
        %v1106 = vadd.f32 %v1002, %v1090
        %v1107 = vadd.f32 %v1003, %v1091
        %v1108 = vadd.f32 %v1004, %v1092
        %v1109 = vadd.f32 %v1005, %v1093
        %v1110 = vadd.f32 %v1006, %v1094
        %v1111 = vadd.f32 %v1007, %v1095
        %v1112 = vld [vmem:[%s2] sm:$0xff]
        %s1113 = scalar_lea.vmem %s2, 8
        %v1114 = vld [vmem:[%s1113] sm:$0xff]
        %vm1115 = vcmask 72704
        %v1117 = vsel %vm1115, %v1114, 0
        %vm1119 = vcmask 1040384
        %v1121 = vsel %vm1119, %v1102, 0
        %v1124 = vsel %vm1119, %v1103, 0
        %1126 = vmatprep.subr.mxu0 %v1101
        %1127 = vmatpush1.msra.mxu0 %v1100
        %1128 = vmatprep.subr.mxu0 %v1124
        %1129 = vmatpush1.msra.mxu0 %v1121
        %1130 = vmatprep.subr.mxu0 0.0
        %1131 = vmatpush1.msra.mxu0 0.0
        %1132 = vmatprep.subr.mxu0 0.0
        %1133 = vmatpush1.msra.mxu0 0.0
        %1134 = vmatprep.subr.mxu0 0.0
        %1135 = vmatpush1.msra.mxu0 0.0
        %1136 = vmatprep.subr.mxu0 0.0
        %1137 = vmatpush1.msra.mxu0 0.0
        %1138 = vmatprep.subr.mxu0 0.0
        %1139 = vmatpush1.msra.mxu0 0.0
        %1140 = vmatprep.subr.mxu0 0.0
        %1141 = vmatpush1.msra.mxu0 0.0
        %1142 = vmatprep.subr.mxu0 0.0
        %1143 = vmatpush1.msra.mxu0 0.0
        %1144 = vmatprep.subr.mxu0 0.0
        %1145 = vmatpush1.msra.mxu0 0.0
        %1146 = vmatprep.subr.mxu0 0.0
        %1147 = vmatpush1.msra.mxu0 0.0
        %1148 = vmatprep.subr.mxu0 0.0
        %1149 = vmatpush1.msra.mxu0 0.0
        %1150 = vmatprep.subr.mxu0 0.0
        %1151 = vmatpush1.msra.mxu0 0.0
        %1152 = vmatprep.subr.mxu0 0.0
        %1153 = vmatpush1.msra.mxu0 0.0
        %1154 = vmatprep.subr.mxu0 0.0
        %1155 = vmatpush1.msra.mxu0 0.0
        %1156 = vmatprep.subr.mxu0 0.0
        %1157 = vmatpush1.msra.mxu0 0.0
        %1158 = vmatprep.subr.mxu0 0.0
        %1159 = vmatpush1.msra.mxu0 0.0
        %1160 = vmatprep.subr.mxu0 0.0
        %1161 = vmatpush1.msra.mxu0 0.0
        %1162 = vmatprep.subr.mxu0 0.0
        %1163 = vmatpush1.msra.mxu0 0.0
        %1164 = vmatprep.subr.mxu0 0.0
        %1165 = vmatpush1.msra.mxu0 0.0
        %1166 = vmatprep.subr.mxu0 0.0
        %1167 = vmatpush1.msra.mxu0 0.0
        %1168 = vmatprep.subr.mxu0 0.0
        %1169 = vmatpush1.msra.mxu0 0.0
        %1170 = vmatprep.subr.mxu0 0.0
        %1171 = vmatpush1.msra.mxu0 0.0
        %1172 = vmatprep.subr.mxu0 0.0
        %1173 = vmatpush1.msra.mxu0 0.0
        %1174 = vmatprep.subr.mxu0 0.0
        %1175 = vmatpush1.msra.mxu0 0.0
        %1176 = vmatprep.subr.mxu0 0.0
        %1177 = vmatpush1.msra.mxu0 0.0
        %1178 = vmatprep.subr.mxu0 0.0
        %1179 = vmatpush1.msra.mxu0 0.0
        %1180 = vmatprep.subr.mxu0 0.0
        %1181 = vmatpush1.msra.mxu0 0.0
        %1182 = vmatprep.subr.mxu0 0.0
        %1183 = vmatpush1.msra.mxu0 0.0
        %1184 = vmatprep.subr.mxu0 0.0
        %1185 = vmatpush1.msra.mxu0 0.0
        %1186 = vmatprep.subr.mxu0 0.0
        %1187 = vmatpush1.msra.mxu0 0.0
        %1188 = vmatprep.subr.mxu0 0.0
        %1189 = vmatpush1.msra.mxu0 0.0
        %1190 = vmatprep.mubr.f32.mxu0 0.0
        %1191 = vmatmul.mubr.f32.gmra.mrb[0].mxu0 %v1117
        %v1192 = vpop.f32.mrb[0].mxu0
        %v1193 = vadd.f32 0.0, %v1192
        %v1194 = vpop.f32.mrb[0].mxu0
        %v1195 = vadd.f32 0.0, %v1194
        %1196 = vdwg.mxu0
        %v1198 = vsel %vm1115, %v1112, 0
        %v1201 = vsel %vm1119, %v1098, 0
        %v1204 = vsel %vm1119, %v1099, 0
        %1206 = vmatprep.subr.mxu0 %v1097
        %1207 = vmatpush1.msra.mxu0 %v1096
        %1208 = vmatprep.subr.mxu0 %v1204
        %1209 = vmatpush1.msra.mxu0 %v1201
        %1210 = vmatprep.subr.mxu0 0.0
        %1211 = vmatpush1.msra.mxu0 0.0
        %1212 = vmatprep.subr.mxu0 0.0
        %1213 = vmatpush1.msra.mxu0 0.0
        %1214 = vmatprep.subr.mxu0 0.0
        %1215 = vmatpush1.msra.mxu0 0.0
        %1216 = vmatprep.subr.mxu0 0.0
        %1217 = vmatpush1.msra.mxu0 0.0
        %1218 = vmatprep.subr.mxu0 0.0
        %1219 = vmatpush1.msra.mxu0 0.0
        %1220 = vmatprep.subr.mxu0 0.0
        %1221 = vmatpush1.msra.mxu0 0.0
        %1222 = vmatprep.subr.mxu0 0.0
        %1223 = vmatpush1.msra.mxu0 0.0
        %1224 = vmatprep.subr.mxu0 0.0
        %1225 = vmatpush1.msra.mxu0 0.0
        %1226 = vmatprep.subr.mxu0 0.0
        %1227 = vmatpush1.msra.mxu0 0.0
        %1228 = vmatprep.subr.mxu0 0.0
        %1229 = vmatpush1.msra.mxu0 0.0
        %1230 = vmatprep.subr.mxu0 0.0
        %1231 = vmatpush1.msra.mxu0 0.0
        %1232 = vmatprep.subr.mxu0 0.0
        %1233 = vmatpush1.msra.mxu0 0.0
        %1234 = vmatprep.subr.mxu0 0.0
        %1235 = vmatpush1.msra.mxu0 0.0
        %1236 = vmatprep.subr.mxu0 0.0
        %1237 = vmatpush1.msra.mxu0 0.0
        %1238 = vmatprep.subr.mxu0 0.0
        %1239 = vmatpush1.msra.mxu0 0.0
        %1240 = vmatprep.subr.mxu0 0.0
        %1241 = vmatpush1.msra.mxu0 0.0
        %1242 = vmatprep.subr.mxu0 0.0
        %1243 = vmatpush1.msra.mxu0 0.0
        %1244 = vmatprep.subr.mxu0 0.0
        %1245 = vmatpush1.msra.mxu0 0.0
        %1246 = vmatprep.subr.mxu0 0.0
        %1247 = vmatpush1.msra.mxu0 0.0
        %1248 = vmatprep.subr.mxu0 0.0
        %1249 = vmatpush1.msra.mxu0 0.0
        %1250 = vmatprep.subr.mxu0 0.0
        %1251 = vmatpush1.msra.mxu0 0.0
        %1252 = vmatprep.subr.mxu0 0.0
        %1253 = vmatpush1.msra.mxu0 0.0
        %1254 = vmatprep.subr.mxu0 0.0
        %1255 = vmatpush1.msra.mxu0 0.0
        %1256 = vmatprep.subr.mxu0 0.0
        %1257 = vmatpush1.msra.mxu0 0.0
        %1258 = vmatprep.subr.mxu0 0.0
        %1259 = vmatpush1.msra.mxu0 0.0
        %1260 = vmatprep.subr.mxu0 0.0
        %1261 = vmatpush1.msra.mxu0 0.0
        %1262 = vmatprep.subr.mxu0 0.0
        %1263 = vmatpush1.msra.mxu0 0.0
        %1264 = vmatprep.subr.mxu0 0.0
        %1265 = vmatpush1.msra.mxu0 0.0
        %1266 = vmatprep.subr.mxu0 0.0
        %1267 = vmatpush1.msra.mxu0 0.0
        %1268 = vmatprep.subr.mxu0 0.0
        %1269 = vmatpush1.msra.mxu0 0.0
        %1270 = vmatprep.mubr.f32.mxu0 0.0
        %1271 = vmatmul.mubr.f32.gmra.mrb[0].mxu0 %v1198
        %v1272 = vpop.f32.mrb[0].mxu0
        %v1273 = vadd.f32 %v1193, %v1272
        %v1274 = vpop.f32.mrb[0].mxu0
        %v1275 = vadd.f32 %v1195, %v1274
        %1276 = vdwg.mxu0
        %s1277 = scalar_lea.vmem %s2, 16
        %v1278 = vld [vmem:[%s1277] sm:$0xff]
        %v1280 = vsel %vm1115, %v1278, 0
        %v1283 = vsel %vm1119, %v1106, 0
        %v1286 = vsel %vm1119, %v1107, 0
        %1288 = vmatprep.subr.mxu0 %v1105
        %1289 = vmatpush1.msra.mxu0 %v1104
        %1290 = vmatprep.subr.mxu0 %v1286
        %1291 = vmatpush1.msra.mxu0 %v1283
        %1292 = vmatprep.subr.mxu0 0.0
        %1293 = vmatpush1.msra.mxu0 0.0
        %1294 = vmatprep.subr.mxu0 0.0
        %1295 = vmatpush1.msra.mxu0 0.0
        %1296 = vmatprep.subr.mxu0 0.0
        %1297 = vmatpush1.msra.mxu0 0.0
        %1298 = vmatprep.subr.mxu0 0.0
        %1299 = vmatpush1.msra.mxu0 0.0
        %1300 = vmatprep.subr.mxu0 0.0
        %1301 = vmatpush1.msra.mxu0 0.0
        %1302 = vmatprep.subr.mxu0 0.0
        %1303 = vmatpush1.msra.mxu0 0.0
        %1304 = vmatprep.subr.mxu0 0.0
        %1305 = vmatpush1.msra.mxu0 0.0
        %1306 = vmatprep.subr.mxu0 0.0
        %1307 = vmatpush1.msra.mxu0 0.0
        %1308 = vmatprep.subr.mxu0 0.0
        %1309 = vmatpush1.msra.mxu0 0.0
        %1310 = vmatprep.subr.mxu0 0.0
        %1311 = vmatpush1.msra.mxu0 0.0
        %1312 = vmatprep.subr.mxu0 0.0
        %1313 = vmatpush1.msra.mxu0 0.0
        %1314 = vmatprep.subr.mxu0 0.0
        %1315 = vmatpush1.msra.mxu0 0.0
        %1316 = vmatprep.subr.mxu0 0.0
        %1317 = vmatpush1.msra.mxu0 0.0
        %1318 = vmatprep.subr.mxu0 0.0
        %1319 = vmatpush1.msra.mxu0 0.0
        %1320 = vmatprep.subr.mxu0 0.0
        %1321 = vmatpush1.msra.mxu0 0.0
        %1322 = vmatprep.subr.mxu0 0.0
        %1323 = vmatpush1.msra.mxu0 0.0
        %1324 = vmatprep.subr.mxu0 0.0
        %1325 = vmatpush1.msra.mxu0 0.0
        %1326 = vmatprep.subr.mxu0 0.0
        %1327 = vmatpush1.msra.mxu0 0.0
        %1328 = vmatprep.subr.mxu0 0.0
        %1329 = vmatpush1.msra.mxu0 0.0
        %1330 = vmatprep.subr.mxu0 0.0
        %1331 = vmatpush1.msra.mxu0 0.0
        %1332 = vmatprep.subr.mxu0 0.0
        %1333 = vmatpush1.msra.mxu0 0.0
        %1334 = vmatprep.subr.mxu0 0.0
        %1335 = vmatpush1.msra.mxu0 0.0
        %1336 = vmatprep.subr.mxu0 0.0
        %1337 = vmatpush1.msra.mxu0 0.0
        %1338 = vmatprep.subr.mxu0 0.0
        %1339 = vmatpush1.msra.mxu0 0.0
        %1340 = vmatprep.subr.mxu0 0.0
        %1341 = vmatpush1.msra.mxu0 0.0
        %1342 = vmatprep.subr.mxu0 0.0
        %1343 = vmatpush1.msra.mxu0 0.0
        %1344 = vmatprep.subr.mxu0 0.0
        %1345 = vmatpush1.msra.mxu0 0.0
        %1346 = vmatprep.subr.mxu0 0.0
        %1347 = vmatpush1.msra.mxu0 0.0
        %1348 = vmatprep.subr.mxu0 0.0
        %1349 = vmatpush1.msra.mxu0 0.0
        %1350 = vmatprep.subr.mxu0 0.0
        %1351 = vmatpush1.msra.mxu0 0.0
        %1352 = vmatprep.mubr.f32.mxu0 0.0
        %1353 = vmatmul.mubr.f32.gmra.mrb[0].mxu0 %v1280
        %v1354 = vpop.f32.mrb[0].mxu0
        %v1355 = vadd.f32 0.0, %v1354
        %v1356 = vpop.f32.mrb[0].mxu0
        %v1357 = vadd.f32 0.0, %v1356
        %1358 = vdwg.mxu0
        %v1359 = vadd.f32 %v1273, %v1355
        %v1360 = vadd.f32 %v1275, %v1357
        %s1361 = scalar_lea.vmem %s2, 24
        %v1362 = vld [vmem:[%s1361] sm:$0xff]
        %v1364 = vsel %vm1115, %v1362, 0
        %v1367 = vsel %vm1119, %v1110, 0
        %v1370 = vsel %vm1119, %v1111, 0
        %1372 = vmatprep.subr.mxu0 %v1109
        %1373 = vmatpush1.msra.mxu0 %v1108
        %1374 = vmatprep.subr.mxu0 %v1370
        %1375 = vmatpush1.msra.mxu0 %v1367
        %1376 = vmatprep.subr.mxu0 0.0
        %1377 = vmatpush1.msra.mxu0 0.0
        %1378 = vmatprep.subr.mxu0 0.0
        %1379 = vmatpush1.msra.mxu0 0.0
        %1380 = vmatprep.subr.mxu0 0.0
        %1381 = vmatpush1.msra.mxu0 0.0
        %1382 = vmatprep.subr.mxu0 0.0
        %1383 = vmatpush1.msra.mxu0 0.0
        %1384 = vmatprep.subr.mxu0 0.0
        %1385 = vmatpush1.msra.mxu0 0.0
        %1386 = vmatprep.subr.mxu0 0.0
        %1387 = vmatpush1.msra.mxu0 0.0
        %1388 = vmatprep.subr.mxu0 0.0
        %1389 = vmatpush1.msra.mxu0 0.0
        %1390 = vmatprep.subr.mxu0 0.0
        %1391 = vmatpush1.msra.mxu0 0.0
        %1392 = vmatprep.subr.mxu0 0.0
        %1393 = vmatpush1.msra.mxu0 0.0
        %1394 = vmatprep.subr.mxu0 0.0
        %1395 = vmatpush1.msra.mxu0 0.0
        %1396 = vmatprep.subr.mxu0 0.0
        %1397 = vmatpush1.msra.mxu0 0.0
        %1398 = vmatprep.subr.mxu0 0.0
        %1399 = vmatpush1.msra.mxu0 0.0
        %1400 = vmatprep.subr.mxu0 0.0
        %1401 = vmatpush1.msra.mxu0 0.0
        %1402 = vmatprep.subr.mxu0 0.0
        %1403 = vmatpush1.msra.mxu0 0.0
        %1404 = vmatprep.subr.mxu0 0.0
        %1405 = vmatpush1.msra.mxu0 0.0
        %1406 = vmatprep.subr.mxu0 0.0
        %1407 = vmatpush1.msra.mxu0 0.0
        %1408 = vmatprep.subr.mxu0 0.0
        %1409 = vmatpush1.msra.mxu0 0.0
        %1410 = vmatprep.subr.mxu0 0.0
        %1411 = vmatpush1.msra.mxu0 0.0
        %1412 = vmatprep.subr.mxu0 0.0
        %1413 = vmatpush1.msra.mxu0 0.0
        %1414 = vmatprep.subr.mxu0 0.0
        %1415 = vmatpush1.msra.mxu0 0.0
        %1416 = vmatprep.subr.mxu0 0.0
        %1417 = vmatpush1.msra.mxu0 0.0
        %1418 = vmatprep.subr.mxu0 0.0
        %1419 = vmatpush1.msra.mxu0 0.0
        %1420 = vmatprep.subr.mxu0 0.0
        %1421 = vmatpush1.msra.mxu0 0.0
        %1422 = vmatprep.subr.mxu0 0.0
        %1423 = vmatpush1.msra.mxu0 0.0
        %1424 = vmatprep.subr.mxu0 0.0
        %1425 = vmatpush1.msra.mxu0 0.0
        %1426 = vmatprep.subr.mxu0 0.0
        %1427 = vmatpush1.msra.mxu0 0.0
        %1428 = vmatprep.subr.mxu0 0.0
        %1429 = vmatpush1.msra.mxu0 0.0
        %1430 = vmatprep.subr.mxu0 0.0
        %1431 = vmatpush1.msra.mxu0 0.0
        %1432 = vmatprep.subr.mxu0 0.0
        %1433 = vmatpush1.msra.mxu0 0.0
        %1434 = vmatprep.subr.mxu0 0.0
        %1435 = vmatpush1.msra.mxu0 0.0
        %1436 = vmatprep.mubr.f32.mxu0 0.0
        %1437 = vmatmul.mubr.f32.gmra.mrb[0].mxu0 %v1364
        %v1438 = vpop.f32.mrb[0].mxu0
        %v1439 = vadd.f32 0.0, %v1438
        %v1440 = vpop.f32.mrb[0].mxu0
        %v1441 = vadd.f32 0.0, %v1440
        %1442 = vdwg.mxu0
        %v1443 = vadd.f32 %v1359, %v1439
        %v1444 = vadd.f32 %v1360, %v1441
        %1446 = vset.pattern.permute.xlu0 0
        %1447 = vperm.xlu0 %1446, %v401
        %v1448 = vpop.permute.xlu0 %1447
        %v1450 = vadd.f32 %v1443, %v1448
        %v1451 = vadd.f32 %v1444, %v1448
        %1452 = vst [vmem:[%s395] sm:$0xff] %v1450
        %1453 = vst [vmem:[%s395 + $0x8] sm:$0xff] %v1451
        %s1454 = scalar_lea.vmem %s362, 56 [#allocation2]
        %v1455 = vld [vmem:[%s1454] sm:$0xff]
        %v1456 = vld [vmem:[%s369] sm:$0xff]
        %v1457 = vld [vmem:[%s369 + $0x8] sm:$0xff]
        %v1458 = vld [vmem:[%s369 + $0x10] sm:$0x1]
        %v1459 = vld [vmem:[%s369 + $0x18] sm:$0x1]
        %v1462 = vunpack.c.l.s4 1966171168
        %v1463 = vunpack.c.0.s8 %v1462
        %v1464 = vlaneseq
        %v1465 = vshrl.u32 %v1464, 7
        %v1466 = vsub.s32 %v1463, %v1465
        %v1467 = vrot.slane %v1455, %v1466
        %v1468 = vcombine.high %v1467, %v1467
        %v1470 = vunpack.c.l.s4 1966171168
        %v1471 = vunpack.c.0.s8 %v1470
        %v1472 = vlaneseq
        %v1473 = vshrl.u32 %v1472, 7
        %v1474 = vsub.s32 %v1471, %v1473
        %v1475 = vrot.slane %v1467, %v1474
        %v1477 = vunpack.c.l.s4 1966171168
        %v1478 = vunpack.c.0.s8 %v1477
        %v1479 = vlaneseq
        %v1480 = vshrl.u32 %v1479, 7
        %v1481 = vsub.s32 %v1478, %v1480
        %v1482 = vrot.slane %v1468, %v1481
        %v1483 = vcombine.high %v1475, %v1475
        %v1484 = vcombine.high %v1482, %v1482
        %v1485 = vlaneseq
        %v1486 = vshrl.u32 %v1485, 7
        %v1487 = vsub.s32 0, %v1486
        %v1488 = vrot.slane %v1475, %v1487
        %v1489 = vlaneseq
        %v1490 = vshrl.u32 %v1489, 7
        %v1491 = vsub.s32 1, %v1490
        %v1492 = vrot.slane %v1475, %v1491
        %v1493 = vlaneseq
        %v1494 = vshrl.u32 %v1493, 7
        %v1495 = vsub.s32 0, %v1494
        %v1496 = vrot.slane %v1482, %v1495
        %v1497 = vlaneseq
        %v1498 = vshrl.u32 %v1497, 7
        %v1499 = vsub.s32 1, %v1498
        %v1500 = vrot.slane %v1482, %v1499
        %v1501 = vlaneseq
        %v1502 = vshrl.u32 %v1501, 7
        %v1503 = vsub.s32 0, %v1502
        %v1504 = vrot.slane %v1483, %v1503
        %v1505 = vlaneseq
        %v1506 = vshrl.u32 %v1505, 7
        %v1507 = vsub.s32 1, %v1506
        %v1508 = vrot.slane %v1483, %v1507
        %v1509 = vlaneseq
        %v1510 = vshrl.u32 %v1509, 7
        %v1511 = vsub.s32 0, %v1510
        %v1512 = vrot.slane %v1484, %v1511
        %v1513 = vlaneseq
        %v1514 = vshrl.u32 %v1513, 7
        %v1515 = vsub.s32 1, %v1514
        %v1516 = vrot.slane %v1484, %v1515
        %v1525 = vmul.f32 %v1488, %v1456
        %v1526 = vmul.f32 %v1492, %v1457
        %v1527 = vmul.f32 %v1488, %v1458
        %v1528 = vmul.f32 %v1492, %v1459
        %v1529 = vmul.f32 %v1496, %v1456
        %v1530 = vmul.f32 %v1500, %v1457
        %v1531 = vmul.f32 %v1496, %v1458
        %v1532 = vmul.f32 %v1500, %v1459
        %v1533 = vmul.f32 %v1504, %v1456
        %v1534 = vmul.f32 %v1508, %v1457
        %v1535 = vmul.f32 %v1504, %v1458
        %v1536 = vmul.f32 %v1508, %v1459
        %v1537 = vmul.f32 %v1512, %v1456
        %v1538 = vmul.f32 %v1516, %v1457
        %v1539 = vmul.f32 %v1512, %v1458
        %v1540 = vmul.f32 %v1516, %v1459
        %s1541 = scalar_lea.vmem %s362, 64 [#allocation2]
        %v1542 = vld [vmem:[%s1541] sm:$0xff]
        %v1543 = vld [vmem:[%s490] sm:$0xff]
        %v1544 = vld [vmem:[%s490 + $0x8] sm:$0xff]
        %v1545 = vld [vmem:[%s490 + $0x10] sm:$0x1]
        %v1546 = vld [vmem:[%s490 + $0x18] sm:$0x1]
        %v1549 = vunpack.c.l.s4 1966171168
        %v1550 = vunpack.c.0.s8 %v1549
        %v1551 = vlaneseq
        %v1552 = vshrl.u32 %v1551, 7
        %v1553 = vsub.s32 %v1550, %v1552
        %v1554 = vrot.slane %v1542, %v1553
        %v1555 = vcombine.high %v1554, %v1554
        %v1557 = vunpack.c.l.s4 1966171168
        %v1558 = vunpack.c.0.s8 %v1557
        %v1559 = vlaneseq
        %v1560 = vshrl.u32 %v1559, 7
        %v1561 = vsub.s32 %v1558, %v1560
        %v1562 = vrot.slane %v1554, %v1561
        %v1564 = vunpack.c.l.s4 1966171168
        %v1565 = vunpack.c.0.s8 %v1564
        %v1566 = vlaneseq
        %v1567 = vshrl.u32 %v1566, 7
        %v1568 = vsub.s32 %v1565, %v1567
        %v1569 = vrot.slane %v1555, %v1568
        %v1570 = vcombine.high %v1562, %v1562
        %v1571 = vcombine.high %v1569, %v1569
        %v1572 = vlaneseq
        %v1573 = vshrl.u32 %v1572, 7
        %v1574 = vsub.s32 0, %v1573
        %v1575 = vrot.slane %v1562, %v1574
        %v1576 = vlaneseq
        %v1577 = vshrl.u32 %v1576, 7
        %v1578 = vsub.s32 1, %v1577
        %v1579 = vrot.slane %v1562, %v1578
        %v1580 = vlaneseq
        %v1581 = vshrl.u32 %v1580, 7
        %v1582 = vsub.s32 0, %v1581
        %v1583 = vrot.slane %v1569, %v1582
        %v1584 = vlaneseq
        %v1585 = vshrl.u32 %v1584, 7
        %v1586 = vsub.s32 1, %v1585
        %v1587 = vrot.slane %v1569, %v1586
        %v1588 = vlaneseq
        %v1589 = vshrl.u32 %v1588, 7
        %v1590 = vsub.s32 0, %v1589
        %v1591 = vrot.slane %v1570, %v1590
        %v1592 = vlaneseq
        %v1593 = vshrl.u32 %v1592, 7
        %v1594 = vsub.s32 1, %v1593
        %v1595 = vrot.slane %v1570, %v1594
        %v1596 = vlaneseq
        %v1597 = vshrl.u32 %v1596, 7
        %v1598 = vsub.s32 0, %v1597
        %v1599 = vrot.slane %v1571, %v1598
        %v1600 = vlaneseq
        %v1601 = vshrl.u32 %v1600, 7
        %v1602 = vsub.s32 1, %v1601
        %v1603 = vrot.slane %v1571, %v1602
        %v1612 = vmul.f32 %v1575, %v1543
        %v1613 = vmul.f32 %v1579, %v1544
        %v1614 = vmul.f32 %v1575, %v1545
        %v1615 = vmul.f32 %v1579, %v1546
        %v1616 = vmul.f32 %v1583, %v1543
        %v1617 = vmul.f32 %v1587, %v1544
        %v1618 = vmul.f32 %v1583, %v1545
        %v1619 = vmul.f32 %v1587, %v1546
        %v1620 = vmul.f32 %v1591, %v1543
        %v1621 = vmul.f32 %v1595, %v1544
        %v1622 = vmul.f32 %v1591, %v1545
        %v1623 = vmul.f32 %v1595, %v1546
        %v1624 = vmul.f32 %v1599, %v1543
        %v1625 = vmul.f32 %v1603, %v1544
        %v1626 = vmul.f32 %v1599, %v1545
        %v1627 = vmul.f32 %v1603, %v1546
        %v1628 = vadd.f32 %v1525, %v1612
        %v1629 = vadd.f32 %v1526, %v1613
        %v1630 = vadd.f32 %v1527, %v1614
        %v1631 = vadd.f32 %v1528, %v1615
        %v1632 = vadd.f32 %v1529, %v1616
        %v1633 = vadd.f32 %v1530, %v1617
        %v1634 = vadd.f32 %v1531, %v1618
        %v1635 = vadd.f32 %v1532, %v1619
        %v1636 = vadd.f32 %v1533, %v1620
        %v1637 = vadd.f32 %v1534, %v1621
        %v1638 = vadd.f32 %v1535, %v1622
        %v1639 = vadd.f32 %v1536, %v1623
        %v1640 = vadd.f32 %v1537, %v1624
        %v1641 = vadd.f32 %v1538, %v1625
        %v1642 = vadd.f32 %v1539, %v1626
        %v1643 = vadd.f32 %v1540, %v1627
        %s1644 = scalar_lea.vmem %s362, 72 [#allocation2]
        %v1645 = vld [vmem:[%s1644] sm:$0xff]
        %v1646 = vld [vmem:[%s594] sm:$0xff]
        %v1647 = vld [vmem:[%s594 + $0x8] sm:$0xff]
        %v1648 = vld [vmem:[%s594 + $0x10] sm:$0x1]
        %v1649 = vld [vmem:[%s594 + $0x18] sm:$0x1]
        %v1652 = vunpack.c.l.s4 1966171168
        %v1653 = vunpack.c.0.s8 %v1652
        %v1654 = vlaneseq
        %v1655 = vshrl.u32 %v1654, 7
        %v1656 = vsub.s32 %v1653, %v1655
        %v1657 = vrot.slane %v1645, %v1656
        %v1658 = vcombine.high %v1657, %v1657
        %v1660 = vunpack.c.l.s4 1966171168
        %v1661 = vunpack.c.0.s8 %v1660
        %v1662 = vlaneseq
        %v1663 = vshrl.u32 %v1662, 7
        %v1664 = vsub.s32 %v1661, %v1663
        %v1665 = vrot.slane %v1657, %v1664
        %v1667 = vunpack.c.l.s4 1966171168
        %v1668 = vunpack.c.0.s8 %v1667
        %v1669 = vlaneseq
        %v1670 = vshrl.u32 %v1669, 7
        %v1671 = vsub.s32 %v1668, %v1670
        %v1672 = vrot.slane %v1658, %v1671
        %v1673 = vcombine.high %v1665, %v1665
        %v1674 = vcombine.high %v1672, %v1672
        %v1675 = vlaneseq
        %v1676 = vshrl.u32 %v1675, 7
        %v1677 = vsub.s32 0, %v1676
        %v1678 = vrot.slane %v1665, %v1677
        %v1679 = vlaneseq
        %v1680 = vshrl.u32 %v1679, 7
        %v1681 = vsub.s32 1, %v1680
        %v1682 = vrot.slane %v1665, %v1681
        %v1683 = vlaneseq
        %v1684 = vshrl.u32 %v1683, 7
        %v1685 = vsub.s32 0, %v1684
        %v1686 = vrot.slane %v1672, %v1685
        %v1687 = vlaneseq
        %v1688 = vshrl.u32 %v1687, 7
        %v1689 = vsub.s32 1, %v1688
        %v1690 = vrot.slane %v1672, %v1689
        %v1691 = vlaneseq
        %v1692 = vshrl.u32 %v1691, 7
        %v1693 = vsub.s32 0, %v1692
        %v1694 = vrot.slane %v1673, %v1693
        %v1695 = vlaneseq
        %v1696 = vshrl.u32 %v1695, 7
        %v1697 = vsub.s32 1, %v1696
        %v1698 = vrot.slane %v1673, %v1697
        %v1699 = vlaneseq
        %v1700 = vshrl.u32 %v1699, 7
        %v1701 = vsub.s32 0, %v1700
        %v1702 = vrot.slane %v1674, %v1701
        %v1703 = vlaneseq
        %v1704 = vshrl.u32 %v1703, 7
        %v1705 = vsub.s32 1, %v1704
        %v1706 = vrot.slane %v1674, %v1705
        %v1715 = vmul.f32 %v1678, %v1646
        %v1716 = vmul.f32 %v1682, %v1647
        %v1717 = vmul.f32 %v1678, %v1648
        %v1718 = vmul.f32 %v1682, %v1649
        %v1719 = vmul.f32 %v1686, %v1646
        %v1720 = vmul.f32 %v1690, %v1647
        %v1721 = vmul.f32 %v1686, %v1648
        %v1722 = vmul.f32 %v1690, %v1649
        %v1723 = vmul.f32 %v1694, %v1646
        %v1724 = vmul.f32 %v1698, %v1647
        %v1725 = vmul.f32 %v1694, %v1648
        %v1726 = vmul.f32 %v1698, %v1649
        %v1727 = vmul.f32 %v1702, %v1646
        %v1728 = vmul.f32 %v1706, %v1647
        %v1729 = vmul.f32 %v1702, %v1648
        %v1730 = vmul.f32 %v1706, %v1649
        %v1731 = vadd.f32 %v1628, %v1715
        %v1732 = vadd.f32 %v1629, %v1716
        %v1733 = vadd.f32 %v1630, %v1717
        %v1734 = vadd.f32 %v1631, %v1718
        %v1735 = vadd.f32 %v1632, %v1719
        %v1736 = vadd.f32 %v1633, %v1720
        %v1737 = vadd.f32 %v1634, %v1721
        %v1738 = vadd.f32 %v1635, %v1722
        %v1739 = vadd.f32 %v1636, %v1723
        %v1740 = vadd.f32 %v1637, %v1724
        %v1741 = vadd.f32 %v1638, %v1725
        %v1742 = vadd.f32 %v1639, %v1726
        %v1743 = vadd.f32 %v1640, %v1727
        %v1744 = vadd.f32 %v1641, %v1728
        %v1745 = vadd.f32 %v1642, %v1729
        %v1746 = vadd.f32 %v1643, %v1730
        %s1747 = scalar_lea.vmem %s362, 80 [#allocation2]
        %v1748 = vld [vmem:[%s1747] sm:$0xff]
        %v1749 = vld [vmem:[%s698] sm:$0xff]
        %v1750 = vld [vmem:[%s698 + $0x8] sm:$0xff]
        %v1751 = vld [vmem:[%s698 + $0x10] sm:$0x1]
        %v1752 = vld [vmem:[%s698 + $0x18] sm:$0x1]
        %v1755 = vunpack.c.l.s4 1966171168
        %v1756 = vunpack.c.0.s8 %v1755
        %v1757 = vlaneseq
        %v1758 = vshrl.u32 %v1757, 7
        %v1759 = vsub.s32 %v1756, %v1758
        %v1760 = vrot.slane %v1748, %v1759
        %v1761 = vcombine.high %v1760, %v1760
        %v1763 = vunpack.c.l.s4 1966171168
        %v1764 = vunpack.c.0.s8 %v1763
        %v1765 = vlaneseq
        %v1766 = vshrl.u32 %v1765, 7
        %v1767 = vsub.s32 %v1764, %v1766
        %v1768 = vrot.slane %v1760, %v1767
        %v1770 = vunpack.c.l.s4 1966171168
        %v1771 = vunpack.c.0.s8 %v1770
        %v1772 = vlaneseq
        %v1773 = vshrl.u32 %v1772, 7
        %v1774 = vsub.s32 %v1771, %v1773
        %v1775 = vrot.slane %v1761, %v1774
        %v1776 = vcombine.high %v1768, %v1768
        %v1777 = vcombine.high %v1775, %v1775
        %v1778 = vlaneseq
        %v1779 = vshrl.u32 %v1778, 7
        %v1780 = vsub.s32 0, %v1779
        %v1781 = vrot.slane %v1768, %v1780
        %v1782 = vlaneseq
        %v1783 = vshrl.u32 %v1782, 7
        %v1784 = vsub.s32 1, %v1783
        %v1785 = vrot.slane %v1768, %v1784
        %v1786 = vlaneseq
        %v1787 = vshrl.u32 %v1786, 7
        %v1788 = vsub.s32 0, %v1787
        %v1789 = vrot.slane %v1775, %v1788
        %v1790 = vlaneseq
        %v1791 = vshrl.u32 %v1790, 7
        %v1792 = vsub.s32 1, %v1791
        %v1793 = vrot.slane %v1775, %v1792
        %v1794 = vlaneseq
        %v1795 = vshrl.u32 %v1794, 7
        %v1796 = vsub.s32 0, %v1795
        %v1797 = vrot.slane %v1776, %v1796
        %v1798 = vlaneseq
        %v1799 = vshrl.u32 %v1798, 7
        %v1800 = vsub.s32 1, %v1799
        %v1801 = vrot.slane %v1776, %v1800
        %v1802 = vlaneseq
        %v1803 = vshrl.u32 %v1802, 7
        %v1804 = vsub.s32 0, %v1803
        %v1805 = vrot.slane %v1777, %v1804
        %v1806 = vlaneseq
        %v1807 = vshrl.u32 %v1806, 7
        %v1808 = vsub.s32 1, %v1807
        %v1809 = vrot.slane %v1777, %v1808
        %v1818 = vmul.f32 %v1781, %v1749
        %v1819 = vmul.f32 %v1785, %v1750
        %v1820 = vmul.f32 %v1781, %v1751
        %v1821 = vmul.f32 %v1785, %v1752
        %v1822 = vmul.f32 %v1789, %v1749
        %v1823 = vmul.f32 %v1793, %v1750
        %v1824 = vmul.f32 %v1789, %v1751
        %v1825 = vmul.f32 %v1793, %v1752
        %v1826 = vmul.f32 %v1797, %v1749
        %v1827 = vmul.f32 %v1801, %v1750
        %v1828 = vmul.f32 %v1797, %v1751
        %v1829 = vmul.f32 %v1801, %v1752
        %v1830 = vmul.f32 %v1805, %v1749
        %v1831 = vmul.f32 %v1809, %v1750
        %v1832 = vmul.f32 %v1805, %v1751
        %v1833 = vmul.f32 %v1809, %v1752
        %v1834 = vadd.f32 %v1731, %v1818
        %v1835 = vadd.f32 %v1732, %v1819
        %v1836 = vadd.f32 %v1733, %v1820
        %v1837 = vadd.f32 %v1734, %v1821
        %v1838 = vadd.f32 %v1735, %v1822
        %v1839 = vadd.f32 %v1736, %v1823
        %v1840 = vadd.f32 %v1737, %v1824
        %v1841 = vadd.f32 %v1738, %v1825
        %v1842 = vadd.f32 %v1739, %v1826
        %v1843 = vadd.f32 %v1740, %v1827
        %v1844 = vadd.f32 %v1741, %v1828
        %v1845 = vadd.f32 %v1742, %v1829
        %v1846 = vadd.f32 %v1743, %v1830
        %v1847 = vadd.f32 %v1744, %v1831
        %v1848 = vadd.f32 %v1745, %v1832
        %v1849 = vadd.f32 %v1746, %v1833
        %s1850 = scalar_lea.vmem %s362, 88 [#allocation2]
        %v1851 = vld [vmem:[%s1850] sm:$0xff]
        %v1852 = vld [vmem:[%s802] sm:$0xff]
        %v1853 = vld [vmem:[%s802 + $0x8] sm:$0xff]
        %v1854 = vld [vmem:[%s802 + $0x10] sm:$0x1]
        %v1855 = vld [vmem:[%s802 + $0x18] sm:$0x1]
        %v1858 = vunpack.c.l.s4 1966171168
        %v1859 = vunpack.c.0.s8 %v1858
        %v1860 = vlaneseq
        %v1861 = vshrl.u32 %v1860, 7
        %v1862 = vsub.s32 %v1859, %v1861
        %v1863 = vrot.slane %v1851, %v1862
        %v1864 = vcombine.high %v1863, %v1863
        %v1866 = vunpack.c.l.s4 1966171168
        %v1867 = vunpack.c.0.s8 %v1866
        %v1868 = vlaneseq
        %v1869 = vshrl.u32 %v1868, 7
        %v1870 = vsub.s32 %v1867, %v1869
        %v1871 = vrot.slane %v1863, %v1870
        %v1873 = vunpack.c.l.s4 1966171168
        %v1874 = vunpack.c.0.s8 %v1873
        %v1875 = vlaneseq
        %v1876 = vshrl.u32 %v1875, 7
        %v1877 = vsub.s32 %v1874, %v1876
        %v1878 = vrot.slane %v1864, %v1877
        %v1879 = vcombine.high %v1871, %v1871
        %v1880 = vcombine.high %v1878, %v1878
        %v1881 = vlaneseq
        %v1882 = vshrl.u32 %v1881, 7
        %v1883 = vsub.s32 0, %v1882
        %v1884 = vrot.slane %v1871, %v1883
        %v1885 = vlaneseq
        %v1886 = vshrl.u32 %v1885, 7
        %v1887 = vsub.s32 1, %v1886
        %v1888 = vrot.slane %v1871, %v1887
        %v1889 = vlaneseq
        %v1890 = vshrl.u32 %v1889, 7
        %v1891 = vsub.s32 0, %v1890
        %v1892 = vrot.slane %v1878, %v1891
        %v1893 = vlaneseq
        %v1894 = vshrl.u32 %v1893, 7
        %v1895 = vsub.s32 1, %v1894
        %v1896 = vrot.slane %v1878, %v1895
        %v1897 = vlaneseq
        %v1898 = vshrl.u32 %v1897, 7
        %v1899 = vsub.s32 0, %v1898
        %v1900 = vrot.slane %v1879, %v1899
        %v1901 = vlaneseq
        %v1902 = vshrl.u32 %v1901, 7
        %v1903 = vsub.s32 1, %v1902
        %v1904 = vrot.slane %v1879, %v1903
        %v1905 = vlaneseq
        %v1906 = vshrl.u32 %v1905, 7
        %v1907 = vsub.s32 0, %v1906
        %v1908 = vrot.slane %v1880, %v1907
        %v1909 = vlaneseq
        %v1910 = vshrl.u32 %v1909, 7
        %v1911 = vsub.s32 1, %v1910
        %v1912 = vrot.slane %v1880, %v1911
        %v1921 = vmul.f32 %v1884, %v1852
        %v1922 = vmul.f32 %v1888, %v1853
        %v1923 = vmul.f32 %v1884, %v1854
        %v1924 = vmul.f32 %v1888, %v1855
        %v1925 = vmul.f32 %v1892, %v1852
        %v1926 = vmul.f32 %v1896, %v1853
        %v1927 = vmul.f32 %v1892, %v1854
        %v1928 = vmul.f32 %v1896, %v1855
        %v1929 = vmul.f32 %v1900, %v1852
        %v1930 = vmul.f32 %v1904, %v1853
        %v1931 = vmul.f32 %v1900, %v1854
        %v1932 = vmul.f32 %v1904, %v1855
        %v1933 = vmul.f32 %v1908, %v1852
        %v1934 = vmul.f32 %v1912, %v1853
        %v1935 = vmul.f32 %v1908, %v1854
        %v1936 = vmul.f32 %v1912, %v1855
        %v1937 = vadd.f32 %v1834, %v1921
        %v1938 = vadd.f32 %v1835, %v1922
        %v1939 = vadd.f32 %v1836, %v1923
        %v1940 = vadd.f32 %v1837, %v1924
        %v1941 = vadd.f32 %v1838, %v1925
        %v1942 = vadd.f32 %v1839, %v1926
        %v1943 = vadd.f32 %v1840, %v1927
        %v1944 = vadd.f32 %v1841, %v1928
        %v1945 = vadd.f32 %v1842, %v1929
        %v1946 = vadd.f32 %v1843, %v1930
        %v1947 = vadd.f32 %v1844, %v1931
        %v1948 = vadd.f32 %v1845, %v1932
        %v1949 = vadd.f32 %v1846, %v1933
        %v1950 = vadd.f32 %v1847, %v1934
        %v1951 = vadd.f32 %v1848, %v1935
        %v1952 = vadd.f32 %v1849, %v1936
        %s1953 = scalar_lea.vmem %s362, 96 [#allocation2]
        %v1954 = vld [vmem:[%s1953] sm:$0xff]
        %v1955 = vld [vmem:[%s906] sm:$0xff]
        %v1956 = vld [vmem:[%s906 + $0x8] sm:$0xff]
        %v1957 = vld [vmem:[%s906 + $0x10] sm:$0x1]
        %v1958 = vld [vmem:[%s906 + $0x18] sm:$0x1]
        %v1961 = vunpack.c.l.s4 1966171168
        %v1962 = vunpack.c.0.s8 %v1961
        %v1963 = vlaneseq
        %v1964 = vshrl.u32 %v1963, 7
        %v1965 = vsub.s32 %v1962, %v1964
        %v1966 = vrot.slane %v1954, %v1965
        %v1967 = vcombine.high %v1966, %v1966
        %v1969 = vunpack.c.l.s4 1966171168
        %v1970 = vunpack.c.0.s8 %v1969
        %v1971 = vlaneseq
        %v1972 = vshrl.u32 %v1971, 7
        %v1973 = vsub.s32 %v1970, %v1972
        %v1974 = vrot.slane %v1966, %v1973
        %v1976 = vunpack.c.l.s4 1966171168
        %v1977 = vunpack.c.0.s8 %v1976
        %v1978 = vlaneseq
        %v1979 = vshrl.u32 %v1978, 7
        %v1980 = vsub.s32 %v1977, %v1979
        %v1981 = vrot.slane %v1967, %v1980
        %v1982 = vcombine.high %v1974, %v1974
        %v1983 = vcombine.high %v1981, %v1981
        %v1984 = vlaneseq
        %v1985 = vshrl.u32 %v1984, 7
        %v1986 = vsub.s32 0, %v1985
        %v1987 = vrot.slane %v1974, %v1986
        %v1988 = vlaneseq
        %v1989 = vshrl.u32 %v1988, 7
        %v1990 = vsub.s32 1, %v1989
        %v1991 = vrot.slane %v1974, %v1990
        %v1992 = vlaneseq
        %v1993 = vshrl.u32 %v1992, 7
        %v1994 = vsub.s32 0, %v1993
        %v1995 = vrot.slane %v1981, %v1994
        %v1996 = vlaneseq
        %v1997 = vshrl.u32 %v1996, 7
        %v1998 = vsub.s32 1, %v1997
        %v1999 = vrot.slane %v1981, %v1998
        %v2000 = vlaneseq
        %v2001 = vshrl.u32 %v2000, 7
        %v2002 = vsub.s32 0, %v2001
        %v2003 = vrot.slane %v1982, %v2002
        %v2004 = vlaneseq
        %v2005 = vshrl.u32 %v2004, 7
        %v2006 = vsub.s32 1, %v2005
        %v2007 = vrot.slane %v1982, %v2006
        %v2008 = vlaneseq
        %v2009 = vshrl.u32 %v2008, 7
        %v2010 = vsub.s32 0, %v2009
        %v2011 = vrot.slane %v1983, %v2010
        %v2012 = vlaneseq
        %v2013 = vshrl.u32 %v2012, 7
        %v2014 = vsub.s32 1, %v2013
        %v2015 = vrot.slane %v1983, %v2014
        %v2024 = vmul.f32 %v1987, %v1955
        %v2025 = vmul.f32 %v1991, %v1956
        %v2026 = vmul.f32 %v1987, %v1957
        %v2027 = vmul.f32 %v1991, %v1958
        %v2028 = vmul.f32 %v1995, %v1955
        %v2029 = vmul.f32 %v1999, %v1956
        %v2030 = vmul.f32 %v1995, %v1957
        %v2031 = vmul.f32 %v1999, %v1958
        %v2032 = vmul.f32 %v2003, %v1955
        %v2033 = vmul.f32 %v2007, %v1956
        %v2034 = vmul.f32 %v2003, %v1957
        %v2035 = vmul.f32 %v2007, %v1958
        %v2036 = vmul.f32 %v2011, %v1955
        %v2037 = vmul.f32 %v2015, %v1956
        %v2038 = vmul.f32 %v2011, %v1957
        %v2039 = vmul.f32 %v2015, %v1958
        %v2040 = vadd.f32 %v1937, %v2024
        %v2041 = vadd.f32 %v1938, %v2025
        %v2042 = vadd.f32 %v1939, %v2026
        %v2043 = vadd.f32 %v1940, %v2027
        %v2044 = vadd.f32 %v1941, %v2028
        %v2045 = vadd.f32 %v1942, %v2029
        %v2046 = vadd.f32 %v1943, %v2030
        %v2047 = vadd.f32 %v1944, %v2031
        %v2048 = vadd.f32 %v1945, %v2032
        %v2049 = vadd.f32 %v1946, %v2033
        %v2050 = vadd.f32 %v1947, %v2034
        %v2051 = vadd.f32 %v1948, %v2035
        %v2052 = vadd.f32 %v1949, %v2036
        %v2053 = vadd.f32 %v1950, %v2037
        %v2054 = vadd.f32 %v1951, %v2038
        %v2055 = vadd.f32 %v1952, %v2039
        %s2056 = scalar_lea.vmem %s362, 104 [#allocation2]
        %v2057 = vld [vmem:[%s2056] sm:$0xff]
        %v2058 = vld [vmem:[%s1010] sm:$0xff]
        %v2059 = vld [vmem:[%s1010 + $0x8] sm:$0xff]
        %v2060 = vld [vmem:[%s1010 + $0x10] sm:$0x1]
        %v2061 = vld [vmem:[%s1010 + $0x18] sm:$0x1]
        %v2064 = vunpack.c.l.s4 1966171168
        %v2065 = vunpack.c.0.s8 %v2064
        %v2066 = vlaneseq
        %v2067 = vshrl.u32 %v2066, 7
        %v2068 = vsub.s32 %v2065, %v2067
        %v2069 = vrot.slane %v2057, %v2068
        %v2070 = vcombine.high %v2069, %v2069
        %v2072 = vunpack.c.l.s4 1966171168
        %v2073 = vunpack.c.0.s8 %v2072
        %v2074 = vlaneseq
        %v2075 = vshrl.u32 %v2074, 7
        %v2076 = vsub.s32 %v2073, %v2075
        %v2077 = vrot.slane %v2069, %v2076
        %v2079 = vunpack.c.l.s4 1966171168
        %v2080 = vunpack.c.0.s8 %v2079
        %v2081 = vlaneseq
        %v2082 = vshrl.u32 %v2081, 7
        %v2083 = vsub.s32 %v2080, %v2082
        %v2084 = vrot.slane %v2070, %v2083
        %v2085 = vcombine.high %v2077, %v2077
        %v2086 = vcombine.high %v2084, %v2084
        %v2087 = vlaneseq
        %v2088 = vshrl.u32 %v2087, 7
        %v2089 = vsub.s32 0, %v2088
        %v2090 = vrot.slane %v2077, %v2089
        %v2091 = vlaneseq
        %v2092 = vshrl.u32 %v2091, 7
        %v2093 = vsub.s32 1, %v2092
        %v2094 = vrot.slane %v2077, %v2093
        %v2095 = vlaneseq
        %v2096 = vshrl.u32 %v2095, 7
        %v2097 = vsub.s32 0, %v2096
        %v2098 = vrot.slane %v2084, %v2097
        %v2099 = vlaneseq
        %v2100 = vshrl.u32 %v2099, 7
        %v2101 = vsub.s32 1, %v2100
        %v2102 = vrot.slane %v2084, %v2101
        %v2103 = vlaneseq
        %v2104 = vshrl.u32 %v2103, 7
        %v2105 = vsub.s32 0, %v2104
        %v2106 = vrot.slane %v2085, %v2105
        %v2107 = vlaneseq
        %v2108 = vshrl.u32 %v2107, 7
        %v2109 = vsub.s32 1, %v2108
        %v2110 = vrot.slane %v2085, %v2109
        %v2111 = vlaneseq
        %v2112 = vshrl.u32 %v2111, 7
        %v2113 = vsub.s32 0, %v2112
        %v2114 = vrot.slane %v2086, %v2113
        %v2115 = vlaneseq
        %v2116 = vshrl.u32 %v2115, 7
        %v2117 = vsub.s32 1, %v2116
        %v2118 = vrot.slane %v2086, %v2117
        %v2127 = vmul.f32 %v2090, %v2058
        %v2128 = vmul.f32 %v2094, %v2059
        %v2129 = vmul.f32 %v2090, %v2060
        %v2130 = vmul.f32 %v2094, %v2061
        %v2131 = vmul.f32 %v2098, %v2058
        %v2132 = vmul.f32 %v2102, %v2059
        %v2133 = vmul.f32 %v2098, %v2060
        %v2134 = vmul.f32 %v2102, %v2061
        %v2135 = vmul.f32 %v2106, %v2058
        %v2136 = vmul.f32 %v2110, %v2059
        %v2137 = vmul.f32 %v2106, %v2060
        %v2138 = vmul.f32 %v2110, %v2061
        %v2139 = vmul.f32 %v2114, %v2058
        %v2140 = vmul.f32 %v2118, %v2059
        %v2141 = vmul.f32 %v2114, %v2060
        %v2142 = vmul.f32 %v2118, %v2061
        %v2143 = vadd.f32 %v2040, %v2127
        %v2144 = vadd.f32 %v2041, %v2128
        %v2145 = vadd.f32 %v2042, %v2129
        %v2146 = vadd.f32 %v2043, %v2130
        %v2147 = vadd.f32 %v2044, %v2131
        %v2148 = vadd.f32 %v2045, %v2132
        %v2149 = vadd.f32 %v2046, %v2133
        %v2150 = vadd.f32 %v2047, %v2134
        %v2151 = vadd.f32 %v2048, %v2135
        %v2152 = vadd.f32 %v2049, %v2136
        %v2153 = vadd.f32 %v2050, %v2137
        %v2154 = vadd.f32 %v2051, %v2138
        %v2155 = vadd.f32 %v2052, %v2139
        %v2156 = vadd.f32 %v2053, %v2140
        %v2157 = vadd.f32 %v2054, %v2141
        %v2158 = vadd.f32 %v2055, %v2142
        %v2159 = vld [vmem:[%s2] sm:$0xff]
        %v2160 = vld [vmem:[%s1113] sm:$0xff]
        %v2162 = vsel %vm1115, %v2160, 0
        %v2165 = vsel %vm1119, %v2149, 0
        %v2168 = vsel %vm1119, %v2150, 0
        %2170 = vmatprep.subr.mxu0 %v2148
        %2171 = vmatpush1.msra.mxu0 %v2147
        %2172 = vmatprep.subr.mxu0 %v2168
        %2173 = vmatpush1.msra.mxu0 %v2165
        %2174 = vmatprep.subr.mxu0 0.0
        %2175 = vmatpush1.msra.mxu0 0.0
        %2176 = vmatprep.subr.mxu0 0.0
        %2177 = vmatpush1.msra.mxu0 0.0
        %2178 = vmatprep.subr.mxu0 0.0
        %2179 = vmatpush1.msra.mxu0 0.0
        %2180 = vmatprep.subr.mxu0 0.0
        %2181 = vmatpush1.msra.mxu0 0.0
        %2182 = vmatprep.subr.mxu0 0.0
        %2183 = vmatpush1.msra.mxu0 0.0
        %2184 = vmatprep.subr.mxu0 0.0
        %2185 = vmatpush1.msra.mxu0 0.0
        %2186 = vmatprep.subr.mxu0 0.0
        %2187 = vmatpush1.msra.mxu0 0.0
        %2188 = vmatprep.subr.mxu0 0.0
        %2189 = vmatpush1.msra.mxu0 0.0
        %2190 = vmatprep.subr.mxu0 0.0
        %2191 = vmatpush1.msra.mxu0 0.0
        %2192 = vmatprep.subr.mxu0 0.0
        %2193 = vmatpush1.msra.mxu0 0.0
        %2194 = vmatprep.subr.mxu0 0.0
        %2195 = vmatpush1.msra.mxu0 0.0
        %2196 = vmatprep.subr.mxu0 0.0
        %2197 = vmatpush1.msra.mxu0 0.0
        %2198 = vmatprep.subr.mxu0 0.0
        %2199 = vmatpush1.msra.mxu0 0.0
        %2200 = vmatprep.subr.mxu0 0.0
        %2201 = vmatpush1.msra.mxu0 0.0
        %2202 = vmatprep.subr.mxu0 0.0
        %2203 = vmatpush1.msra.mxu0 0.0
        %2204 = vmatprep.subr.mxu0 0.0
        %2205 = vmatpush1.msra.mxu0 0.0
        %2206 = vmatprep.subr.mxu0 0.0
        %2207 = vmatpush1.msra.mxu0 0.0
        %2208 = vmatprep.subr.mxu0 0.0
        %2209 = vmatpush1.msra.mxu0 0.0
        %2210 = vmatprep.subr.mxu0 0.0
        %2211 = vmatpush1.msra.mxu0 0.0
        %2212 = vmatprep.subr.mxu0 0.0
        %2213 = vmatpush1.msra.mxu0 0.0
        %2214 = vmatprep.subr.mxu0 0.0
        %2215 = vmatpush1.msra.mxu0 0.0
        %2216 = vmatprep.subr.mxu0 0.0
        %2217 = vmatpush1.msra.mxu0 0.0
        %2218 = vmatprep.subr.mxu0 0.0
        %2219 = vmatpush1.msra.mxu0 0.0
        %2220 = vmatprep.subr.mxu0 0.0
        %2221 = vmatpush1.msra.mxu0 0.0
        %2222 = vmatprep.subr.mxu0 0.0
        %2223 = vmatpush1.msra.mxu0 0.0
        %2224 = vmatprep.subr.mxu0 0.0
        %2225 = vmatpush1.msra.mxu0 0.0
        %2226 = vmatprep.subr.mxu0 0.0
        %2227 = vmatpush1.msra.mxu0 0.0
        %2228 = vmatprep.subr.mxu0 0.0
        %2229 = vmatpush1.msra.mxu0 0.0
        %2230 = vmatprep.subr.mxu0 0.0
        %2231 = vmatpush1.msra.mxu0 0.0
        %2232 = vmatprep.subr.mxu0 0.0
        %2233 = vmatpush1.msra.mxu0 0.0
        %2234 = vmatprep.mubr.f32.mxu0 0.0
        %2235 = vmatmul.mubr.f32.gmra.mrb[0].mxu0 %v2162
        %v2236 = vpop.f32.mrb[0].mxu0
        %v2237 = vadd.f32 0.0, %v2236
        %v2238 = vpop.f32.mrb[0].mxu0
        %v2239 = vadd.f32 0.0, %v2238
        %2240 = vdwg.mxu0
        %v2242 = vsel %vm1115, %v2159, 0
        %v2245 = vsel %vm1119, %v2145, 0
        %v2248 = vsel %vm1119, %v2146, 0
        %2250 = vmatprep.subr.mxu0 %v2144
        %2251 = vmatpush1.msra.mxu0 %v2143
        %2252 = vmatprep.subr.mxu0 %v2248
        %2253 = vmatpush1.msra.mxu0 %v2245
        %2254 = vmatprep.subr.mxu0 0.0
        %2255 = vmatpush1.msra.mxu0 0.0
        %2256 = vmatprep.subr.mxu0 0.0
        %2257 = vmatpush1.msra.mxu0 0.0
        %2258 = vmatprep.subr.mxu0 0.0
        %2259 = vmatpush1.msra.mxu0 0.0
        %2260 = vmatprep.subr.mxu0 0.0
        %2261 = vmatpush1.msra.mxu0 0.0
        %2262 = vmatprep.subr.mxu0 0.0
        %2263 = vmatpush1.msra.mxu0 0.0
        %2264 = vmatprep.subr.mxu0 0.0
        %2265 = vmatpush1.msra.mxu0 0.0
        %2266 = vmatprep.subr.mxu0 0.0
        %2267 = vmatpush1.msra.mxu0 0.0
        %2268 = vmatprep.subr.mxu0 0.0
        %2269 = vmatpush1.msra.mxu0 0.0
        %2270 = vmatprep.subr.mxu0 0.0
        %2271 = vmatpush1.msra.mxu0 0.0
        %2272 = vmatprep.subr.mxu0 0.0
        %2273 = vmatpush1.msra.mxu0 0.0
        %2274 = vmatprep.subr.mxu0 0.0
        %2275 = vmatpush1.msra.mxu0 0.0
        %2276 = vmatprep.subr.mxu0 0.0
        %2277 = vmatpush1.msra.mxu0 0.0
        %2278 = vmatprep.subr.mxu0 0.0
        %2279 = vmatpush1.msra.mxu0 0.0
        %2280 = vmatprep.subr.mxu0 0.0
        %2281 = vmatpush1.msra.mxu0 0.0
        %2282 = vmatprep.subr.mxu0 0.0
        %2283 = vmatpush1.msra.mxu0 0.0
        %2284 = vmatprep.subr.mxu0 0.0
        %2285 = vmatpush1.msra.mxu0 0.0
        %2286 = vmatprep.subr.mxu0 0.0
        %2287 = vmatpush1.msra.mxu0 0.0
        %2288 = vmatprep.subr.mxu0 0.0
        %2289 = vmatpush1.msra.mxu0 0.0
        %2290 = vmatprep.subr.mxu0 0.0
        %2291 = vmatpush1.msra.mxu0 0.0
        %2292 = vmatprep.subr.mxu0 0.0
        %2293 = vmatpush1.msra.mxu0 0.0
        %2294 = vmatprep.subr.mxu0 0.0
        %2295 = vmatpush1.msra.mxu0 0.0
        %2296 = vmatprep.subr.mxu0 0.0
        %2297 = vmatpush1.msra.mxu0 0.0
        %2298 = vmatprep.subr.mxu0 0.0
        %2299 = vmatpush1.msra.mxu0 0.0
        %2300 = vmatprep.subr.mxu0 0.0
        %2301 = vmatpush1.msra.mxu0 0.0
        %2302 = vmatprep.subr.mxu0 0.0
        %2303 = vmatpush1.msra.mxu0 0.0
        %2304 = vmatprep.subr.mxu0 0.0
        %2305 = vmatpush1.msra.mxu0 0.0
        %2306 = vmatprep.subr.mxu0 0.0
        %2307 = vmatpush1.msra.mxu0 0.0
        %2308 = vmatprep.subr.mxu0 0.0
        %2309 = vmatpush1.msra.mxu0 0.0
        %2310 = vmatprep.subr.mxu0 0.0
        %2311 = vmatpush1.msra.mxu0 0.0
        %2312 = vmatprep.subr.mxu0 0.0
        %2313 = vmatpush1.msra.mxu0 0.0
        %2314 = vmatprep.mubr.f32.mxu0 0.0
        %2315 = vmatmul.mubr.f32.gmra.mrb[0].mxu0 %v2242
        %v2316 = vpop.f32.mrb[0].mxu0
        %v2317 = vadd.f32 %v2237, %v2316
        %v2318 = vpop.f32.mrb[0].mxu0
        %v2319 = vadd.f32 %v2239, %v2318
        %2320 = vdwg.mxu0
        %v2321 = vld [vmem:[%s1277] sm:$0xff]
        %v2323 = vsel %vm1115, %v2321, 0
        %v2326 = vsel %vm1119, %v2153, 0
        %v2329 = vsel %vm1119, %v2154, 0
        %2331 = vmatprep.subr.mxu0 %v2152
        %2332 = vmatpush1.msra.mxu0 %v2151
        %2333 = vmatprep.subr.mxu0 %v2329
        %2334 = vmatpush1.msra.mxu0 %v2326
        %2335 = vmatprep.subr.mxu0 0.0
        %2336 = vmatpush1.msra.mxu0 0.0
        %2337 = vmatprep.subr.mxu0 0.0
        %2338 = vmatpush1.msra.mxu0 0.0
        %2339 = vmatprep.subr.mxu0 0.0
        %2340 = vmatpush1.msra.mxu0 0.0
        %2341 = vmatprep.subr.mxu0 0.0
        %2342 = vmatpush1.msra.mxu0 0.0
        %2343 = vmatprep.subr.mxu0 0.0
        %2344 = vmatpush1.msra.mxu0 0.0
        %2345 = vmatprep.subr.mxu0 0.0
        %2346 = vmatpush1.msra.mxu0 0.0
        %2347 = vmatprep.subr.mxu0 0.0
        %2348 = vmatpush1.msra.mxu0 0.0
        %2349 = vmatprep.subr.mxu0 0.0
        %2350 = vmatpush1.msra.mxu0 0.0
        %2351 = vmatprep.subr.mxu0 0.0
        %2352 = vmatpush1.msra.mxu0 0.0
        %2353 = vmatprep.subr.mxu0 0.0
        %2354 = vmatpush1.msra.mxu0 0.0
        %2355 = vmatprep.subr.mxu0 0.0
        %2356 = vmatpush1.msra.mxu0 0.0
        %2357 = vmatprep.subr.mxu0 0.0
        %2358 = vmatpush1.msra.mxu0 0.0
        %2359 = vmatprep.subr.mxu0 0.0
        %2360 = vmatpush1.msra.mxu0 0.0
        %2361 = vmatprep.subr.mxu0 0.0
        %2362 = vmatpush1.msra.mxu0 0.0
        %2363 = vmatprep.subr.mxu0 0.0
        %2364 = vmatpush1.msra.mxu0 0.0
        %2365 = vmatprep.subr.mxu0 0.0
        %2366 = vmatpush1.msra.mxu0 0.0
        %2367 = vmatprep.subr.mxu0 0.0
        %2368 = vmatpush1.msra.mxu0 0.0
        %2369 = vmatprep.subr.mxu0 0.0
        %2370 = vmatpush1.msra.mxu0 0.0
        %2371 = vmatprep.subr.mxu0 0.0
        %2372 = vmatpush1.msra.mxu0 0.0
        %2373 = vmatprep.subr.mxu0 0.0
        %2374 = vmatpush1.msra.mxu0 0.0
        %2375 = vmatprep.subr.mxu0 0.0
        %2376 = vmatpush1.msra.mxu0 0.0
        %2377 = vmatprep.subr.mxu0 0.0
        %2378 = vmatpush1.msra.mxu0 0.0
        %2379 = vmatprep.subr.mxu0 0.0
        %2380 = vmatpush1.msra.mxu0 0.0
        %2381 = vmatprep.subr.mxu0 0.0
        %2382 = vmatpush1.msra.mxu0 0.0
        %2383 = vmatprep.subr.mxu0 0.0
        %2384 = vmatpush1.msra.mxu0 0.0
        %2385 = vmatprep.subr.mxu0 0.0
        %2386 = vmatpush1.msra.mxu0 0.0
        %2387 = vmatprep.subr.mxu0 0.0
        %2388 = vmatpush1.msra.mxu0 0.0
        %2389 = vmatprep.subr.mxu0 0.0
        %2390 = vmatpush1.msra.mxu0 0.0
        %2391 = vmatprep.subr.mxu0 0.0
        %2392 = vmatpush1.msra.mxu0 0.0
        %2393 = vmatprep.subr.mxu0 0.0
        %2394 = vmatpush1.msra.mxu0 0.0
        %2395 = vmatprep.mubr.f32.mxu0 0.0
        %2396 = vmatmul.mubr.f32.gmra.mrb[0].mxu0 %v2323
        %v2397 = vpop.f32.mrb[0].mxu0
        %v2398 = vadd.f32 0.0, %v2397
        %v2399 = vpop.f32.mrb[0].mxu0
        %v2400 = vadd.f32 0.0, %v2399
        %2401 = vdwg.mxu0
        %v2402 = vadd.f32 %v2317, %v2398
        %v2403 = vadd.f32 %v2319, %v2400
        %v2404 = vld [vmem:[%s1361] sm:$0xff]
        %v2406 = vsel %vm1115, %v2404, 0
        %v2409 = vsel %vm1119, %v2157, 0
        %v2412 = vsel %vm1119, %v2158, 0
        %2414 = vmatprep.subr.mxu0 %v2156
        %2415 = vmatpush1.msra.mxu0 %v2155
        %2416 = vmatprep.subr.mxu0 %v2412
        %2417 = vmatpush1.msra.mxu0 %v2409
        %2418 = vmatprep.subr.mxu0 0.0
        %2419 = vmatpush1.msra.mxu0 0.0
        %2420 = vmatprep.subr.mxu0 0.0
        %2421 = vmatpush1.msra.mxu0 0.0
        %2422 = vmatprep.subr.mxu0 0.0
        %2423 = vmatpush1.msra.mxu0 0.0
        %2424 = vmatprep.subr.mxu0 0.0
        %2425 = vmatpush1.msra.mxu0 0.0
        %2426 = vmatprep.subr.mxu0 0.0
        %2427 = vmatpush1.msra.mxu0 0.0
        %2428 = vmatprep.subr.mxu0 0.0
        %2429 = vmatpush1.msra.mxu0 0.0
        %2430 = vmatprep.subr.mxu0 0.0
        %2431 = vmatpush1.msra.mxu0 0.0
        %2432 = vmatprep.subr.mxu0 0.0
        %2433 = vmatpush1.msra.mxu0 0.0
        %2434 = vmatprep.subr.mxu0 0.0
        %2435 = vmatpush1.msra.mxu0 0.0
        %2436 = vmatprep.subr.mxu0 0.0
        %2437 = vmatpush1.msra.mxu0 0.0
        %2438 = vmatprep.subr.mxu0 0.0
        %2439 = vmatpush1.msra.mxu0 0.0
        %2440 = vmatprep.subr.mxu0 0.0
        %2441 = vmatpush1.msra.mxu0 0.0
        %2442 = vmatprep.subr.mxu0 0.0
        %2443 = vmatpush1.msra.mxu0 0.0
        %2444 = vmatprep.subr.mxu0 0.0
        %2445 = vmatpush1.msra.mxu0 0.0
        %2446 = vmatprep.subr.mxu0 0.0
        %2447 = vmatpush1.msra.mxu0 0.0
        %2448 = vmatprep.subr.mxu0 0.0
        %2449 = vmatpush1.msra.mxu0 0.0
        %2450 = vmatprep.subr.mxu0 0.0
        %2451 = vmatpush1.msra.mxu0 0.0
        %2452 = vmatprep.subr.mxu0 0.0
        %2453 = vmatpush1.msra.mxu0 0.0
        %2454 = vmatprep.subr.mxu0 0.0
        %2455 = vmatpush1.msra.mxu0 0.0
        %2456 = vmatprep.subr.mxu0 0.0
        %2457 = vmatpush1.msra.mxu0 0.0
        %2458 = vmatprep.subr.mxu0 0.0
        %2459 = vmatpush1.msra.mxu0 0.0
        %2460 = vmatprep.subr.mxu0 0.0
        %2461 = vmatpush1.msra.mxu0 0.0
        %2462 = vmatprep.subr.mxu0 0.0
        %2463 = vmatpush1.msra.mxu0 0.0
        %2464 = vmatprep.subr.mxu0 0.0
        %2465 = vmatpush1.msra.mxu0 0.0
        %2466 = vmatprep.subr.mxu0 0.0
        %2467 = vmatpush1.msra.mxu0 0.0
        %2468 = vmatprep.subr.mxu0 0.0
        %2469 = vmatpush1.msra.mxu0 0.0
        %2470 = vmatprep.subr.mxu0 0.0
        %2471 = vmatpush1.msra.mxu0 0.0
        %2472 = vmatprep.subr.mxu0 0.0
        %2473 = vmatpush1.msra.mxu0 0.0
        %2474 = vmatprep.subr.mxu0 0.0
        %2475 = vmatpush1.msra.mxu0 0.0
        %2476 = vmatprep.subr.mxu0 0.0
        %2477 = vmatpush1.msra.mxu0 0.0
        %2478 = vmatprep.mubr.f32.mxu0 0.0
        %2479 = vmatmul.mubr.f32.gmra.mrb[0].mxu0 %v2406
        %v2480 = vpop.f32.mrb[0].mxu0
        %v2481 = vadd.f32 0.0, %v2480
        %v2482 = vpop.f32.mrb[0].mxu0
        %v2483 = vadd.f32 0.0, %v2482
        %2484 = vdwg.mxu0
        %v2485 = vadd.f32 %v2402, %v2481
        %v2486 = vadd.f32 %v2403, %v2483
        %v2487 = vadd.f32 %v2485, %v1448
        %v2488 = vadd.f32 %v2486, %v1448
        %s2489 = scalar_lea.vmem %s395, 16 [#allocation4]
        %2490 = vst [vmem:[%s2489] sm:$0xff] %v2487
        %2491 = vst [vmem:[%s2489 + $0x8] sm:$0xff] %v2488
        %s2492 = sand.u32 %s136, 1
        %s2493 = scalar_lea.sflag [#allocation5], %s2492
        %s2494 = sand.u32 %s136, 1
        %s2495 = smul.addr %s2494, 32
        %s2496 = scalar_lea.vmem [#allocation4], %s2495
        // Predicated region
        $region98: #{sphere_conv_forward.1} parent=88 // pred_check
          %p2497 = pneg %p146
        $region99: #{sphere_conv_forward.1} parent=88 // pred_check_branch
          %2499 = sbr.rel (%p2497) target = $region101
        $region100: #{sphere_conv_forward.1} parent=88 // pred_region
          %s2500 = smul.u32 2, %s23
          %s2501 = smul.u32 2, %s22
          %s2503 = ssub.s32 512, 512
          %2504 = vsyncadd %s2493, %s2503
          %s2505 = smul.addr %s2500, 4
          %s2506 = sadd.s32 %s2501, %s2505
          %s2507 = smul.addr %s2506, 128
          %s2508 = scalar_lea.hbm %s4, %s2507
          %s2509 = sshll.u32 %s2496, 4
          %s2510 = int_to_ptr.vmem [resolvable:$true] %s2509
          %2515 = dma.vmem_to_hbm [thread:$0]  %s2510, 512, %s2508, %s2493, 256, 512, 16
        $region101: #{sphere_conv_forward.1} parent=88 // pred_fallthru
          _
      $region89: #{sphere_conv_forward.1} parent=5 // pred_fallthru
        _
      %p2516 = scmp.le.s32.totalorder 2, %s13
      // Predicated region
      $region102: #{sphere_conv_forward.1} parent=5 // pred_check
        %p2517 = pneg %p2516
      $region103: #{sphere_conv_forward.1} parent=5 // pred_check_branch
        %2519 = sbr.rel (%p2517) target = $region105
      $region104: #{sphere_conv_forward.1} parent=5 // pred_region
        %s2520 = ssub.s32 %s13, 2
        // Predicated region
        $region106: #{sphere_conv_forward.1} parent=104 // pred_check
          %p2521 = pneg %p152
        $region107: #{sphere_conv_forward.1} parent=104 // pred_check_branch
          %2523 = sbr.rel (%p2521) target = $region109
        $region108: #{sphere_conv_forward.1} parent=104 // pred_region
          %s2524 = sand.u32 %s137, 1
          %s2525 = scalar_lea.sflag [#allocation5], %s2524
          %s2526 = sand.u32 %s137, 1
          %s2527 = smul.addr %s2526, 32
          %s2528 = scalar_lea.vmem [#allocation4], %s2527
          %2529 = dma.done %s2525, 512
        $region109: #{sphere_conv_forward.1} parent=104 // pred_fallthru
          _
      $region105: #{sphere_conv_forward.1} parent=5 // pred_fallthru
        _
    $region6: #{sphere_conv_forward.1} parent=1 // loop_footer
      %s17 = sadd.s32 1, %s13
    $region7: #{sphere_conv_forward.1} parent=1 // loop_footer_branch
      %12 = sbr.rel target = $region3
    $region8: #{sphere_conv_forward.1} parent=1 // loop_exit
      _
    %2530 = vsyncpa [#allocation5], 1
    %s2531 = scalar_lea.sflag [#allocation5], 1
    %2532 = vsyncpa %s2531, 1

</llo_original>
